<compile_context>
chip_gen: v5e
topology: v5e:2x2
jax: 0.10.0
libtpu: 0.0.40
codegen_flags: <defaults>
</compile_context>

<pallas_src>
from functools import partial

import jax
import jax.numpy as jnp
import numpy as np
from jax.experimental import pallas as pl
from jax.experimental.pallas import tpu as pltpu

K = 5          # conv kernel size
PAD = 2        # padding each side
BN_EPS = 1e-5
MXU_DTYPE = jnp.float32   # bfloat16: faster MXU / fewer bytes, looser accuracy


# ---------------------------------------------------------------------------
# in-kernel helpers
# ---------------------------------------------------------------------------
def _shift_rows(x, s):
    """out[r] = x[(r + s) mod R]; rows that wrapped are masked by the caller."""
    r = x.shape[0]
    j = s % r
    if j == 0:
        return x
    return jnp.concatenate([x[j:, :], x[:j, :]], axis=0)


def _conv_rows(x, w, pos, seqlen):
    """1-D conv (kernel K, padding PAD) over the rows of x.

    x:   (R, Cin) f32 -- R rows are contiguous length-`seqlen` sequences
    w:   (K*Cin, Cout) tap-major merged weight, W[k*Cin+ci, co] = w_t[co, ci, k]
    pos: (R, 1) int32, pos[r] = r mod seqlen
    returns (R, Cout) f32 via one MXU matmul (f32 accumulation).
    """
    taps = []
    for k in range(K):
        s = k - PAD
        if s == 0:
            taps.append(x)
        else:
            shifted = _shift_rows(x, s)
            valid = jnp.logical_and(pos + s >= 0, pos + s < seqlen)
            taps.append(jnp.where(valid, shifted, 0.0))
    lhs = jnp.concatenate(taps, axis=1)                               # (R, K*Cin)
    return jnp.dot(lhs.astype(MXU_DTYPE), w.astype(MXU_DTYPE),
                   preferred_element_type=jnp.float32)


def _stats(y):
    """Per-channel [sum ; sum-of-squares] of y (R, C) -> (2, C) f32."""
    return jnp.concatenate([jnp.sum(y, axis=0, keepdims=True),
                            jnp.sum(y * y, axis=0, keepdims=True)], axis=0)


# ---------------------------------------------------------------------------
# kernels
# ---------------------------------------------------------------------------
def _conv1_kernel(x_ref, w_ref, y_ref, ps_ref, *, seqlen, tb):
    """x_ref: (TB, Cin, L) NCL block.  Transpose in-register -> conv1 -> stats.
    y_ref: (TB*L, Cout) channels-last slab, ps_ref: (1, 2, Cout)."""
    w = w_ref[...]
    pos = jax.lax.broadcasted_iota(jnp.int32, (seqlen, 1), 0)         # row in seq
    cout = y_ref.shape[-1]
    ssum = jnp.zeros((1, cout), jnp.float32)
    ssq = jnp.zeros((1, cout), jnp.float32)
    for t in range(tb):                                               # static unroll
        xt = jnp.transpose(x_ref[t].astype(jnp.float32), (1, 0))     # (L, Cin)
        yt = _conv_rows(xt, w, pos, seqlen)                           # (L, Cout)
        y_ref[pl.ds(t * seqlen, seqlen), :] = yt.astype(y_ref.dtype)
        ssum = ssum + jnp.sum(yt, axis=0, keepdims=True)
        ssq = ssq + jnp.sum(yt * yt, axis=0, keepdims=True)
    ps_ref[0] = jnp.concatenate([ssum, ssq], axis=0)


def _bn1_relu_conv2_kernel(h_ref, sc_ref, sh_ref, w_ref, pos_ref,
                           y_ref, ps_ref, *, seqlen):
    """bn1-normalize -> ReLU -> conv2 -> BN2 partial stats.
    h_ref / y_ref: (TB*L, Cout) -- one MXU matmul with M = TB*L."""
    hn = jnp.maximum(h_ref[...] * sc_ref[...] + sh_ref[...], 0.0)
    y = _conv_rows(hn, w_ref[...], pos_ref[...], seqlen)
    y_ref[...] = y.astype(y_ref.dtype)
    ps_ref[0] = _stats(y)


def _bn2_relu_kernel(y_ref, sc_ref, sh_ref, o_ref, *, seqlen, tb):
    """bn2-normalize -> ReLU, written straight back as NCL (no wrapper transpose)."""
    z = jnp.maximum(y_ref[...] * sc_ref[...] + sh_ref[...], 0.0)      # (TB*L, Cout)
    for t in range(tb):
        zt = z[t * seqlen:(t + 1) * seqlen, :]                        # (L, Cout)
        o_ref[t] = jnp.transpose(zt, (1, 0)).astype(o_ref.dtype)      # (Cout, L)


# ---------------------------------------------------------------------------
# wrapper helpers
# ---------------------------------------------------------------------------
def _merge_weight(w):
    """torch (Cout, Cin, K) -> tap-major (K*Cin, Cout): row k*Cin+ci <-> tap k, ch ci."""
    cout, cin, k = w.shape
    return jnp.transpose(w.astype(jnp.float32), (2, 1, 0)).reshape(k * cin, cout)


def _fold_bn(pstats, count, gamma, beta):
    """Reduce per-block [sum; sumsq] partials and fold BN into scale/shift (f32).
    NOTE: var = E[x^2] - E[x]^2 in f32 -- fine for roughly zero-mean conv outputs;
    switch to a two-pass variance if |mean| >> std at very large N*L."""
    s = jnp.sum(pstats, axis=0)                                       # (2, C)
    mean = s[0] / count
    var = jnp.maximum(s[1] / count - mean * mean, 0.0)                # biased (training)
    scale = gamma.astype(jnp.float32) * jax.lax.rsqrt(var + BN_EPS)
    shift = beta.astype(jnp.float32) - mean * scale
    return scale.reshape(1, -1), shift.reshape(1, -1)


def _pick_tb(n, l, target_rows=512):
    """Batch rows per grid step.  TB must divide N; when the grid has more than
    one step the flat (TB*L, C) blocks also need TB*L % 8 == 0 (sublane rule)."""
    valid = [tb for tb in range(1, n + 1)
             if n % tb == 0 and (tb == n or (tb * l) % 8 == 0)]
    under = [tb for tb in valid if tb * l <= max(target_rows, l)]
    return max(under) if under else min(valid)


# ---------------------------------------------------------------------------
# public entry point
# ---------------------------------------------------------------------------
def double_conv_pallas(x_ncl, params):
    """x_ncl: (N, C_in, L) float32, PyTorch NCL layout. Returns (N, C_out, L)."""
    # conv biases b1/b2 are accepted but unused: a per-channel bias added before
    # training-mode BatchNorm is cancelled exactly by the mean subtraction.
    w1, b1, g1, bt1, w2, b2, g2, bt2 = params
    del b1, b2
    N, Cin, L = x_ncl.shape
    Cout = w1.shape[0]

    TB = _pick_tb(N, L)
    G = N // TB
    R = TB * L                                                        # rows per block

    w1m = _merge_weight(w1)                                           # (K*Cin, Cout)
    w2m = _merge_weight(w2)                                           # (K*Cout, Cout)
    pos = (jnp.arange(R, dtype=jnp.int32) % L)[:, None]               # (R, 1)

    cparams = pltpu.CompilerParams(
        dimension_semantics=("parallel",),      # megacore shard over batch on v7x
        vmem_limit_bytes=32 * 1024 * 1024,
    )
    row_spec = pl.BlockSpec((1, Cout), lambda g: (0, 0))
    pos_spec = pl.BlockSpec((R, 1), lambda g: (0, 0))

    # --- call 1: conv1 (+ BN1 partial stats); NCL input transposed in-kernel ---
    h, ps1 = pl.pallas_call(
        partial(_conv1_kernel, seqlen=L, tb=TB),
        grid=(G,),
        in_specs=[pl.BlockSpec((TB, Cin, L), lambda g: (g, 0, 0)),
                  pl.BlockSpec((K * Cin, Cout), lambda g: (0, 0))],
        out_specs=[pl.BlockSpec((R, Cout), lambda g: (g, 0)),
                   pl.BlockSpec((1, 2, Cout), lambda g: (g, 0, 0))],
        out_shape=[jax.ShapeDtypeStruct((N * L, Cout), jnp.float32),
                   jax.ShapeDtypeStruct((G, 2, Cout), jnp.float32)],
        compiler_params=cparams,
    )(x_ncl.astype(jnp.float32), w1m)

    sc1, sh1 = _fold_bn(ps1, float(N * L), g1, bt1)

    # --- call 2: bn1 + relu + conv2 (+ BN2 partial stats); y aliases h's buffer ---
    y, ps2 = pl.pallas_call(
        partial(_bn1_relu_conv2_kernel, seqlen=L),
        grid=(G,),
        in_specs=[pl.BlockSpec((R, Cout), lambda g: (g, 0)),
                  row_spec, row_spec,
                  pl.BlockSpec((K * Cout, Cout), lambda g: (0, 0)),
                  pos_spec],
        out_specs=[pl.BlockSpec((R, Cout), lambda g: (g, 0)),
                   pl.BlockSpec((1, 2, Cout), lambda g: (g, 0, 0))],
        out_shape=[jax.ShapeDtypeStruct((N * L, Cout), jnp.float32),
                   jax.ShapeDtypeStruct((G, 2, Cout), jnp.float32)],
        input_output_aliases={0: 0},
        compiler_params=cparams,
    )(h, sc1, sh1, w2m, pos)

    sc2, sh2 = _fold_bn(ps2, float(N * L), g2, bt2)

    # --- call 3: bn2 + relu; writes the final NCL output directly ---
    out = pl.pallas_call(
        partial(_bn2_relu_kernel, seqlen=L, tb=TB),
        grid=(G,),
        in_specs=[pl.BlockSpec((R, Cout), lambda g: (g, 0)),
                  row_spec, row_spec],
        out_specs=pl.BlockSpec((TB, Cout, L), lambda g: (g, 0, 0)),
        out_shape=jax.ShapeDtypeStruct((N, Cout, L), jnp.float32),
        compiler_params=cparams,
    )(y, sc2, sh2)

    return out


# ---------------------------------------------------------------------------
# pure-JAX reference (PyTorch semantics: NCL, training-mode BN, with conv bias)
# ---------------------------------------------------------------------------
def double_conv_ref(x_ncl, params):
    w1, b1, g1, bt1, w2, b2, g2, bt2 = params

    def conv1d(x, w, b):
        y = jax.lax.conv_general_dilated(
            x, w, window_strides=(1,), padding=((PAD, PAD),),
            dimension_numbers=('NCH', 'OIH', 'NCH'))
        return y + b[None, :, None]

    def bn_relu(y, g, bt):
        mu = jnp.mean(y, axis=(0, 2), keepdims=True)
        var = jnp.mean((y - mu) ** 2, axis=(0, 2), keepdims=True)
        y = (y - mu) * jax.lax.rsqrt(var + BN_EPS) * g[None, :, None] + bt[None, :, None]
        return jnp.maximum(y, 0.0)

    h = bn_relu(conv1d(x_ncl, w1, b1), g1, bt1)
    return bn_relu(conv1d(h, w2, b2), g2, bt2)


if __name__ == "__main__":
    N, IN_CH, OUT_CH, L = 2, 4, 8, 16

    key = jax.random.PRNGKey(0)
    ks = jax.random.split(key, 9)
    # deterministic synthetic parameters (shapes match nn.Conv1d / nn.BatchNorm1d)
    w1 = jax.random.normal(ks[0], (OUT_CH, IN_CH, K), jnp.float32) * 0.2
    b1 = jax.random.normal(ks[1], (OUT_CH,), jnp.float32) * 0.1
    g1 = 1.0 + 0.1 * jax.random.normal(ks[2], (OUT_CH,), jnp.float32)
    bt1 = 0.1 * jax.random.normal(ks[3], (OUT_CH,), jnp.float32)
    w2 = jax.random.normal(ks[4], (OUT_CH, OUT_CH, K), jnp.float32) * 0.2
    b2 = jax.random.normal(ks[5], (OUT_CH,), jnp.float32) * 0.1
    g2 = 1.0 + 0.1 * jax.random.normal(ks[6], (OUT_CH,), jnp.float32)
    bt2 = 0.1 * jax.random.normal(ks[7], (OUT_CH,), jnp.float32)
    params = (w1, b1, g1, bt1, w2, b2, g2, bt2)

    x = jax.random.normal(ks[8], (N, IN_CH, L), jnp.float32)

    out = jax.block_until_ready(jax.jit(double_conv_pallas)(x, params))
    ref = jax.block_until_ready(double_conv_ref(x, params))

    np.testing.assert_allclose(np.asarray(out), np.asarray(ref), rtol=1e-4, atol=1e-4)
    print("KERNEL_OK")
</pallas_src>

<mosaic_0001>
module attributes {stable_mosaic.version = 11 : i64} {
  func.func @_conv1_kernel(%arg0: i32, %arg1: memref<2x4x16xf32, #tpu.memory_space<vmem>>, %arg2: memref<20x8xf32, #tpu.memory_space<vmem>>, %arg3: memref<32x8xf32, #tpu.memory_space<vmem>>, %arg4: memref<1x2x8xf32, #tpu.memory_space<vmem>>) attributes {dimension_semantics = [#tpu.dimension_semantics<parallel>], iteration_bounds = array<i64: 1>, scalar_prefetch = 0 : i64, scratch_operands = 0 : i64, tpu.core_type = #tpu.core_type<tc>, window_params = [{transform_indices = @transform_0, window_bounds = array<i64: 2, 4, 16>}, {pipeline_mode = #tpu.pipeline_mode<synchronous>, transform_indices = @transform_1, window_bounds = array<i64: 20, 8>}, {transform_indices = @transform_2, window_bounds = array<i64: 32, 8>}, {transform_indices = @transform_3, window_bounds = array<i64: 1, 2, 8>}]} {
    %c0 = arith.constant 0 : index
    %c0_0 = arith.constant 0 : index
    %0 = vector.load %arg2[%c0, %c0_0] : memref<20x8xf32, #tpu.memory_space<vmem>>, vector<20x8xf32>
    %1 = tpu.iota {dimensions = array<i32: 0>} : vector<16x1xi32>
    %cst = arith.constant 0.000000e+00 : f32
    %2 = vector.broadcast %cst : f32 to vector<1x8xf32>
    %cst_1 = arith.constant 0.000000e+00 : f32
    %3 = vector.broadcast %cst_1 : f32 to vector<1x8xf32>
    %c0_2 = arith.constant 0 : index
    %c0_3 = arith.constant 0 : index
    %c0_4 = arith.constant 0 : index
    %4 = vector.load %arg1[%c0_2, %c0_3, %c0_4] : memref<2x4x16xf32, #tpu.memory_space<vmem>>, vector<1x4x16xf32>
    %5 = vector.shape_cast %4 : vector<1x4x16xf32> to vector<4x16xf32>
    %6 = tpu.transpose %5, [1, 0] : vector<4x16xf32> -> vector<16x4xf32>
    %7 = vector.extract_strided_slice %6 {offsets = [14, 0], sizes = [2, 4], strides = [1, 1]} : vector<16x4xf32> to vector<2x4xf32>
    %8 = vector.extract_strided_slice %6 {offsets = [0, 0], sizes = [14, 4], strides = [1, 1]} : vector<16x4xf32> to vector<14x4xf32>
    %9 = tpu.concatenate %7, %8 in 0 : vector<2x4xf32>, vector<14x4xf32> -> vector<16x4xf32>
    %c-2_i32 = arith.constant -2 : i32
    %10 = vector.broadcast %c-2_i32 : i32 to vector<16x1xi32>
    %11 = arith.addi %1, %10 : vector<16x1xi32>
    %c0_i32 = arith.constant 0 : i32
    %12 = vector.broadcast %c0_i32 : i32 to vector<16x1xi32>
    %13 = arith.cmpi sge, %11, %12 : vector<16x1xi32>
    %c-2_i32_5 = arith.constant -2 : i32
    %14 = vector.broadcast %c-2_i32_5 : i32 to vector<16x1xi32>
    %15 = arith.addi %1, %14 : vector<16x1xi32>
    %c16_i32 = arith.constant 16 : i32
    %16 = vector.broadcast %c16_i32 : i32 to vector<16x1xi32>
    %17 = arith.cmpi slt, %15, %16 : vector<16x1xi32>
    %18 = arith.andi %13, %17 : vector<16x1xi1>
    %cst_6 = arith.constant 0.000000e+00 : f32
    %19 = vector.shape_cast %18 : vector<16x1xi1> to vector<16x1xi1>
    %20 = vector.broadcast %19 : vector<16x1xi1> to vector<16x4xi1>
    %21 = vector.broadcast %cst_6 : f32 to vector<16x4xf32>
    %22 = arith.select %20, %9, %21 : vector<16x4xi1>, vector<16x4xf32>
    %23 = vector.extract_strided_slice %6 {offsets = [15, 0], sizes = [1, 4], strides = [1, 1]} : vector<16x4xf32> to vector<1x4xf32>
    %24 = vector.extract_strided_slice %6 {offsets = [0, 0], sizes = [15, 4], strides = [1, 1]} : vector<16x4xf32> to vector<15x4xf32>
    %25 = tpu.concatenate %23, %24 in 0 : vector<1x4xf32>, vector<15x4xf32> -> vector<16x4xf32>
    %c-1_i32 = arith.constant -1 : i32
    %26 = vector.broadcast %c-1_i32 : i32 to vector<16x1xi32>
    %27 = arith.addi %1, %26 : vector<16x1xi32>
    %c0_i32_7 = arith.constant 0 : i32
    %28 = vector.broadcast %c0_i32_7 : i32 to vector<16x1xi32>
    %29 = arith.cmpi sge, %27, %28 : vector<16x1xi32>
    %c-1_i32_8 = arith.constant -1 : i32
    %30 = vector.broadcast %c-1_i32_8 : i32 to vector<16x1xi32>
    %31 = arith.addi %1, %30 : vector<16x1xi32>
    %c16_i32_9 = arith.constant 16 : i32
    %32 = vector.broadcast %c16_i32_9 : i32 to vector<16x1xi32>
    %33 = arith.cmpi slt, %31, %32 : vector<16x1xi32>
    %34 = arith.andi %29, %33 : vector<16x1xi1>
    %cst_10 = arith.constant 0.000000e+00 : f32
    %35 = vector.shape_cast %34 : vector<16x1xi1> to vector<16x1xi1>
    %36 = vector.broadcast %35 : vector<16x1xi1> to vector<16x4xi1>
    %37 = vector.broadcast %cst_10 : f32 to vector<16x4xf32>
    %38 = arith.select %36, %25, %37 : vector<16x4xi1>, vector<16x4xf32>
    %39 = vector.extract_strided_slice %6 {offsets = [1, 0], sizes = [15, 4], strides = [1, 1]} : vector<16x4xf32> to vector<15x4xf32>
    %40 = vector.extract_strided_slice %6 {offsets = [0, 0], sizes = [1, 4], strides = [1, 1]} : vector<16x4xf32> to vector<1x4xf32>
    %41 = tpu.concatenate %39, %40 in 0 : vector<15x4xf32>, vector<1x4xf32> -> vector<16x4xf32>
    %c1_i32 = arith.constant 1 : i32
    %42 = vector.broadcast %c1_i32 : i32 to vector<16x1xi32>
    %43 = arith.addi %1, %42 : vector<16x1xi32>
    %c0_i32_11 = arith.constant 0 : i32
    %44 = vector.broadcast %c0_i32_11 : i32 to vector<16x1xi32>
    %45 = arith.cmpi sge, %43, %44 : vector<16x1xi32>
    %c1_i32_12 = arith.constant 1 : i32
    %46 = vector.broadcast %c1_i32_12 : i32 to vector<16x1xi32>
    %47 = arith.addi %1, %46 : vector<16x1xi32>
    %c16_i32_13 = arith.constant 16 : i32
    %48 = vector.broadcast %c16_i32_13 : i32 to vector<16x1xi32>
    %49 = arith.cmpi slt, %47, %48 : vector<16x1xi32>
    %50 = arith.andi %45, %49 : vector<16x1xi1>
    %cst_14 = arith.constant 0.000000e+00 : f32
    %51 = vector.shape_cast %50 : vector<16x1xi1> to vector<16x1xi1>
    %52 = vector.broadcast %51 : vector<16x1xi1> to vector<16x4xi1>
    %53 = vector.broadcast %cst_14 : f32 to vector<16x4xf32>
    %54 = arith.select %52, %41, %53 : vector<16x4xi1>, vector<16x4xf32>
    %55 = vector.extract_strided_slice %6 {offsets = [2, 0], sizes = [14, 4], strides = [1, 1]} : vector<16x4xf32> to vector<14x4xf32>
    %56 = vector.extract_strided_slice %6 {offsets = [0, 0], sizes = [2, 4], strides = [1, 1]} : vector<16x4xf32> to vector<2x4xf32>
    %57 = tpu.concatenate %55, %56 in 0 : vector<14x4xf32>, vector<2x4xf32> -> vector<16x4xf32>
    %c2_i32 = arith.constant 2 : i32
    %58 = vector.broadcast %c2_i32 : i32 to vector<16x1xi32>
    %59 = arith.addi %1, %58 : vector<16x1xi32>
    %c0_i32_15 = arith.constant 0 : i32
    %60 = vector.broadcast %c0_i32_15 : i32 to vector<16x1xi32>
    %61 = arith.cmpi sge, %59, %60 : vector<16x1xi32>
    %c2_i32_16 = arith.constant 2 : i32
    %62 = vector.broadcast %c2_i32_16 : i32 to vector<16x1xi32>
    %63 = arith.addi %1, %62 : vector<16x1xi32>
    %c16_i32_17 = arith.constant 16 : i32
    %64 = vector.broadcast %c16_i32_17 : i32 to vector<16x1xi32>
    %65 = arith.cmpi slt, %63, %64 : vector<16x1xi32>
    %66 = arith.andi %61, %65 : vector<16x1xi1>
    %cst_18 = arith.constant 0.000000e+00 : f32
    %67 = vector.shape_cast %66 : vector<16x1xi1> to vector<16x1xi1>
    %68 = vector.broadcast %67 : vector<16x1xi1> to vector<16x4xi1>
    %69 = vector.broadcast %cst_18 : f32 to vector<16x4xf32>
    %70 = arith.select %68, %57, %69 : vector<16x4xi1>, vector<16x4xf32>
    %71 = tpu.concatenate %22, %38, %6, %54, %70 in 1 : vector<16x4xf32>, vector<16x4xf32>, vector<16x4xf32>, vector<16x4xf32>, vector<16x4xf32> -> vector<16x20xf32>
    %cst_19 = arith.constant dense<0.000000e+00> : vector<16x8xf32>
    %72 = tpu.matmul %71, %0, %cst_19 {dimension_numbers = #tpu.dot_dimension_numbers<[1], [0], [0], [1], [0, 0, 1, 1], [], []>} : vector<16x20xf32>, vector<20x8xf32>, vector<16x8xf32> -> vector<16x8xf32>
    %c0_20 = arith.constant 0 : index
    %c0_21 = arith.constant 0 : index
    %73 = vector.load %arg3[%c0_20, %c0_21] : memref<32x8xf32, #tpu.memory_space<vmem>>, vector<16x8xf32>
    tpu.vector_store %arg3[%c0_20, %c0_21], %72 {strides = array<i32>} : memref<32x8xf32, #tpu.memory_space<vmem>>, vector<16x8xf32>,
    %cst_22 = arith.constant dense<0.000000e+00> : vector<8xf32>
    %74 = vector.multi_reduction <add>, %72, %cst_22 [0] : vector<16x8xf32> to vector<8xf32>
    %75 = vector.shape_cast %74 : vector<8xf32> to vector<1x8xf32>
    %76 = arith.addf %2, %75 : vector<1x8xf32>
    %77 = arith.mulf %72, %72 : vector<16x8xf32>
    %cst_23 = arith.constant dense<0.000000e+00> : vector<8xf32>
    %78 = vector.multi_reduction <add>, %77, %cst_23 [0] : vector<16x8xf32> to vector<8xf32>
    %79 = vector.shape_cast %78 : vector<8xf32> to vector<1x8xf32>
    %80 = arith.addf %3, %79 : vector<1x8xf32>
    %c1 = arith.constant 1 : index
    %c0_24 = arith.constant 0 : index
    %c0_25 = arith.constant 0 : index
    %81 = vector.load %arg1[%c1, %c0_24, %c0_25] : memref<2x4x16xf32, #tpu.memory_space<vmem>>, vector<1x4x16xf32>
    %82 = vector.shape_cast %81 : vector<1x4x16xf32> to vector<4x16xf32>
    %83 = tpu.transpose %82, [1, 0] : vector<4x16xf32> -> vector<16x4xf32>
    %84 = vector.extract_strided_slice %83 {offsets = [14, 0], sizes = [2, 4], strides = [1, 1]} : vector<16x4xf32> to vector<2x4xf32>
    %85 = vector.extract_strided_slice %83 {offsets = [0, 0], sizes = [14, 4], strides = [1, 1]} : vector<16x4xf32> to vector<14x4xf32>
    %86 = tpu.concatenate %84, %85 in 0 : vector<2x4xf32>, vector<14x4xf32> -> vector<16x4xf32>
    %c-2_i32_26 = arith.constant -2 : i32
    %87 = vector.broadcast %c-2_i32_26 : i32 to vector<16x1xi32>
    %88 = arith.addi %1, %87 : vector<16x1xi32>
    %c0_i32_27 = arith.constant 0 : i32
    %89 = vector.broadcast %c0_i32_27 : i32 to vector<16x1xi32>
    %90 = arith.cmpi sge, %88, %89 : vector<16x1xi32>
    %c-2_i32_28 = arith.constant -2 : i32
    %91 = vector.broadcast %c-2_i32_28 : i32 to vector<16x1xi32>
    %92 = arith.addi %1, %91 : vector<16x1xi32>
    %c16_i32_29 = arith.constant 16 : i32
    %93 = vector.broadcast %c16_i32_29 : i32 to vector<16x1xi32>
    %94 = arith.cmpi slt, %92, %93 : vector<16x1xi32>
    %95 = arith.andi %90, %94 : vector<16x1xi1>
    %cst_30 = arith.constant 0.000000e+00 : f32
    %96 = vector.shape_cast %95 : vector<16x1xi1> to vector<16x1xi1>
    %97 = vector.broadcast %96 : vector<16x1xi1> to vector<16x4xi1>
    %98 = vector.broadcast %cst_30 : f32 to vector<16x4xf32>
    %99 = arith.select %97, %86, %98 : vector<16x4xi1>, vector<16x4xf32>
    %100 = vector.extract_strided_slice %83 {offsets = [15, 0], sizes = [1, 4], strides = [1, 1]} : vector<16x4xf32> to vector<1x4xf32>
    %101 = vector.extract_strided_slice %83 {offsets = [0, 0], sizes = [15, 4], strides = [1, 1]} : vector<16x4xf32> to vector<15x4xf32>
    %102 = tpu.concatenate %100, %101 in 0 : vector<1x4xf32>, vector<15x4xf32> -> vector<16x4xf32>
    %c-1_i32_31 = arith.constant -1 : i32
    %103 = vector.broadcast %c-1_i32_31 : i32 to vector<16x1xi32>
    %104 = arith.addi %1, %103 : vector<16x1xi32>
    %c0_i32_32 = arith.constant 0 : i32
    %105 = vector.broadcast %c0_i32_32 : i32 to vector<16x1xi32>
    %106 = arith.cmpi sge, %104, %105 : vector<16x1xi32>
    %c-1_i32_33 = arith.constant -1 : i32
    %107 = vector.broadcast %c-1_i32_33 : i32 to vector<16x1xi32>
    %108 = arith.addi %1, %107 : vector<16x1xi32>
    %c16_i32_34 = arith.constant 16 : i32
    %109 = vector.broadcast %c16_i32_34 : i32 to vector<16x1xi32>
    %110 = arith.cmpi slt, %108, %109 : vector<16x1xi32>
    %111 = arith.andi %106, %110 : vector<16x1xi1>
    %cst_35 = arith.constant 0.000000e+00 : f32
    %112 = vector.shape_cast %111 : vector<16x1xi1> to vector<16x1xi1>
    %113 = vector.broadcast %112 : vector<16x1xi1> to vector<16x4xi1>
    %114 = vector.broadcast %cst_35 : f32 to vector<16x4xf32>
    %115 = arith.select %113, %102, %114 : vector<16x4xi1>, vector<16x4xf32>
    %116 = vector.extract_strided_slice %83 {offsets = [1, 0], sizes = [15, 4], strides = [1, 1]} : vector<16x4xf32> to vector<15x4xf32>
    %117 = vector.extract_strided_slice %83 {offsets = [0, 0], sizes = [1, 4], strides = [1, 1]} : vector<16x4xf32> to vector<1x4xf32>
    %118 = tpu.concatenate %116, %117 in 0 : vector<15x4xf32>, vector<1x4xf32> -> vector<16x4xf32>
    %c1_i32_36 = arith.constant 1 : i32
    %119 = vector.broadcast %c1_i32_36 : i32 to vector<16x1xi32>
    %120 = arith.addi %1, %119 : vector<16x1xi32>
    %c0_i32_37 = arith.constant 0 : i32
    %121 = vector.broadcast %c0_i32_37 : i32 to vector<16x1xi32>
    %122 = arith.cmpi sge, %120, %121 : vector<16x1xi32>
    %c1_i32_38 = arith.constant 1 : i32
    %123 = vector.broadcast %c1_i32_38 : i32 to vector<16x1xi32>
    %124 = arith.addi %1, %123 : vector<16x1xi32>
    %c16_i32_39 = arith.constant 16 : i32
    %125 = vector.broadcast %c16_i32_39 : i32 to vector<16x1xi32>
    %126 = arith.cmpi slt, %124, %125 : vector<16x1xi32>
    %127 = arith.andi %122, %126 : vector<16x1xi1>
    %cst_40 = arith.constant 0.000000e+00 : f32
    %128 = vector.shape_cast %127 : vector<16x1xi1> to vector<16x1xi1>
    %129 = vector.broadcast %128 : vector<16x1xi1> to vector<16x4xi1>
    %130 = vector.broadcast %cst_40 : f32 to vector<16x4xf32>
    %131 = arith.select %129, %118, %130 : vector<16x4xi1>, vector<16x4xf32>
    %132 = vector.extract_strided_slice %83 {offsets = [2, 0], sizes = [14, 4], strides = [1, 1]} : vector<16x4xf32> to vector<14x4xf32>
    %133 = vector.extract_strided_slice %83 {offsets = [0, 0], sizes = [2, 4], strides = [1, 1]} : vector<16x4xf32> to vector<2x4xf32>
    %134 = tpu.concatenate %132, %133 in 0 : vector<14x4xf32>, vector<2x4xf32> -> vector<16x4xf32>
    %c2_i32_41 = arith.constant 2 : i32
    %135 = vector.broadcast %c2_i32_41 : i32 to vector<16x1xi32>
    %136 = arith.addi %1, %135 : vector<16x1xi32>
    %c0_i32_42 = arith.constant 0 : i32
    %137 = vector.broadcast %c0_i32_42 : i32 to vector<16x1xi32>
    %138 = arith.cmpi sge, %136, %137 : vector<16x1xi32>
    %c2_i32_43 = arith.constant 2 : i32
    %139 = vector.broadcast %c2_i32_43 : i32 to vector<16x1xi32>
    %140 = arith.addi %1, %139 : vector<16x1xi32>
    %c16_i32_44 = arith.constant 16 : i32
    %141 = vector.broadcast %c16_i32_44 : i32 to vector<16x1xi32>
    %142 = arith.cmpi slt, %140, %141 : vector<16x1xi32>
    %143 = arith.andi %138, %142 : vector<16x1xi1>
    %cst_45 = arith.constant 0.000000e+00 : f32
    %144 = vector.shape_cast %143 : vector<16x1xi1> to vector<16x1xi1>
    %145 = vector.broadcast %144 : vector<16x1xi1> to vector<16x4xi1>
    %146 = vector.broadcast %cst_45 : f32 to vector<16x4xf32>
    %147 = arith.select %145, %134, %146 : vector<16x4xi1>, vector<16x4xf32>
    %148 = tpu.concatenate %99, %115, %83, %131, %147 in 1 : vector<16x4xf32>, vector<16x4xf32>, vector<16x4xf32>, vector<16x4xf32>, vector<16x4xf32> -> vector<16x20xf32>
    %cst_46 = arith.constant dense<0.000000e+00> : vector<16x8xf32>
    %149 = tpu.matmul %148, %0, %cst_46 {dimension_numbers = #tpu.dot_dimension_numbers<[1], [0], [0], [1], [0, 0, 1, 1], [], []>} : vector<16x20xf32>, vector<20x8xf32>, vector<16x8xf32> -> vector<16x8xf32>
    %c16 = arith.constant 16 : index
    %c0_47 = arith.constant 0 : index
    %150 = vector.load %arg3[%c16, %c0_47] : memref<32x8xf32, #tpu.memory_space<vmem>>, vector<16x8xf32>
    tpu.vector_store %arg3[%c16, %c0_47], %149 {strides = array<i32>} : memref<32x8xf32, #tpu.memory_space<vmem>>, vector<16x8xf32>,
    %cst_48 = arith.constant dense<0.000000e+00> : vector<8xf32>
    %151 = vector.multi_reduction <add>, %149, %cst_48 [0] : vector<16x8xf32> to vector<8xf32>
    %152 = vector.shape_cast %151 : vector<8xf32> to vector<1x8xf32>
    %153 = arith.addf %76, %152 : vector<1x8xf32>
    %154 = arith.mulf %149, %149 : vector<16x8xf32>
    %cst_49 = arith.constant dense<0.000000e+00> : vector<8xf32>
    %155 = vector.multi_reduction <add>, %154, %cst_49 [0] : vector<16x8xf32> to vector<8xf32>
    %156 = vector.shape_cast %155 : vector<8xf32> to vector<1x8xf32>
    %157 = arith.addf %80, %156 : vector<1x8xf32>
    %158 = tpu.concatenate %153, %157 in 0 : vector<1x8xf32>, vector<1x8xf32> -> vector<2x8xf32>
    %c0_50 = arith.constant 0 : index
    %c0_51 = arith.constant 0 : index
    %c0_52 = arith.constant 0 : index
    %159 = vector.load %arg4[%c0_50, %c0_51, %c0_52] : memref<1x2x8xf32, #tpu.memory_space<vmem>>, vector<1x2x8xf32>
    %160 = vector.shape_cast %159 : vector<1x2x8xf32> to vector<2x8xf32>
    %161 = vector.shape_cast %158 : vector<2x8xf32> to vector<1x2x8xf32>
    tpu.vector_store %arg4[%c0_50, %c0_51, %c0_52], %161 {strides = array<i32>} : memref<1x2x8xf32, #tpu.memory_space<vmem>>, vector<1x2x8xf32>,
    return
  }
  func.func @transform_0(%arg0: i32) -> (i32, i32, i32) {
    %c0_i32 = arith.constant 0 : i32
    %c0_i32_0 = arith.constant 0 : i32
    %c0_i32_1 = arith.constant 0 : i32
    return %arg0, %c0_i32, %c0_i32_0 : i32, i32, i32
  }
  func.func @transform_1(%arg0: i32) -> (i32, i32) {
    %c0_i32 = arith.constant 0 : i32
    %c0_i32_0 = arith.constant 0 : i32
    %c0_i32_1 = arith.constant 0 : i32
    return %c0_i32, %c0_i32_0 : i32, i32
  }
  func.func @transform_2(%arg0: i32) -> (i32, i32) {
    %c0_i32 = arith.constant 0 : i32
    %c0_i32_0 = arith.constant 0 : i32
    return %arg0, %c0_i32 : i32, i32
  }
  func.func @transform_3(%arg0: i32) -> (i32, i32, i32) {
    %c0_i32 = arith.constant 0 : i32
    %c0_i32_0 = arith.constant 0 : i32
    %c0_i32_1 = arith.constant 0 : i32
    return %arg0, %c0_i32, %c0_i32_0 : i32, i32, i32
  }
}

module attributes {stable_mosaic.version = 11 : i64} {
  func.func @_bn2_relu_kernel(%arg0: i32, %arg1: memref<32x8xf32, #tpu.memory_space<vmem>>, %arg2: memref<1x8xf32, #tpu.memory_space<vmem>>, %arg3: memref<1x8xf32, #tpu.memory_space<vmem>>, %arg4: memref<2x8x16xf32, #tpu.memory_space<vmem>>) attributes {dimension_semantics = [#tpu.dimension_semantics<parallel>], iteration_bounds = array<i64: 1>, scalar_prefetch = 0 : i64, scratch_operands = 0 : i64, tpu.core_type = #tpu.core_type<tc>, window_params = [{transform_indices = @transform_0, window_bounds = array<i64: 32, 8>}, {pipeline_mode = #tpu.pipeline_mode<synchronous>, transform_indices = @transform_1, window_bounds = array<i64: 1, 8>}, {pipeline_mode = #tpu.pipeline_mode<synchronous>, transform_indices = @transform_2, window_bounds = array<i64: 1, 8>}, {transform_indices = @transform_3, window_bounds = array<i64: 2, 8, 16>}]} {
    %c0 = arith.constant 0 : index
    %c0_0 = arith.constant 0 : index
    %0 = vector.load %arg1[%c0, %c0_0] : memref<32x8xf32, #tpu.memory_space<vmem>>, vector<32x8xf32>
    %c0_1 = arith.constant 0 : index
    %c0_2 = arith.constant 0 : index
    %1 = vector.load %arg2[%c0_1, %c0_2] : memref<1x8xf32, #tpu.memory_space<vmem>>, vector<1x8xf32>
    %2 = vector.broadcast %1 : vector<1x8xf32> to vector<32x8xf32>
    %3 = arith.mulf %0, %2 : vector<32x8xf32>
    %c0_3 = arith.constant 0 : index
    %c0_4 = arith.constant 0 : index
    %4 = vector.load %arg3[%c0_3, %c0_4] : memref<1x8xf32, #tpu.memory_space<vmem>>, vector<1x8xf32>
    %5 = vector.broadcast %4 : vector<1x8xf32> to vector<32x8xf32>
    %6 = arith.addf %3, %5 : vector<32x8xf32>
    %cst = arith.constant 0.000000e+00 : f32
    %7 = vector.broadcast %cst : f32 to vector<32x8xf32>
    %8 = arith.maximumf %6, %7 : vector<32x8xf32>
    %9 = vector.extract_strided_slice %8 {offsets = [0, 0], sizes = [16, 8], strides = [1, 1]} : vector<32x8xf32> to vector<16x8xf32>
    %10 = tpu.transpose %9, [1, 0] : vector<16x8xf32> -> vector<8x16xf32>
    %c0_5 = arith.constant 0 : index
    %c0_6 = arith.constant 0 : index
    %c0_7 = arith.constant 0 : index
    %11 = vector.load %arg4[%c0_5, %c0_6, %c0_7] : memref<2x8x16xf32, #tpu.memory_space<vmem>>, vector<1x8x16xf32>
    %12 = vector.shape_cast %11 : vector<1x8x16xf32> to vector<8x16xf32>
    %13 = vector.shape_cast %10 : vector<8x16xf32> to vector<1x8x16xf32>
    tpu.vector_store %arg4[%c0_5, %c0_6, %c0_7], %13 {strides = array<i32>} : memref<2x8x16xf32, #tpu.memory_space<vmem>>, vector<1x8x16xf32>,
    %14 = vector.extract_strided_slice %8 {offsets = [16, 0], sizes = [16, 8], strides = [1, 1]} : vector<32x8xf32> to vector<16x8xf32>
    %15 = tpu.transpose %14, [1, 0] : vector<16x8xf32> -> vector<8x16xf32>
    %c1 = arith.constant 1 : index
    %c0_8 = arith.constant 0 : index
    %c0_9 = arith.constant 0 : index
    %16 = vector.load %arg4[%c1, %c0_8, %c0_9] : memref<2x8x16xf32, #tpu.memory_space<vmem>>, vector<1x8x16xf32>
    %17 = vector.shape_cast %16 : vector<1x8x16xf32> to vector<8x16xf32>
    %18 = vector.shape_cast %15 : vector<8x16xf32> to vector<1x8x16xf32>
    tpu.vector_store %arg4[%c1, %c0_8, %c0_9], %18 {strides = array<i32>} : memref<2x8x16xf32, #tpu.memory_space<vmem>>, vector<1x8x16xf32>,
    return
  }
  func.func @transform_0(%arg0: i32) -> (i32, i32) {
    %c0_i32 = arith.constant 0 : i32
    %c0_i32_0 = arith.constant 0 : i32
    return %arg0, %c0_i32 : i32, i32
  }
  func.func @transform_1(%arg0: i32) -> (i32, i32) {
    %c0_i32 = arith.constant 0 : i32
    %c0_i32_0 = arith.constant 0 : i32
    %c0_i32_1 = arith.constant 0 : i32
    return %c0_i32, %c0_i32_0 : i32, i32
  }
  func.func @transform_2(%arg0: i32) -> (i32, i32) {
    %c0_i32 = arith.constant 0 : i32
    %c0_i32_0 = arith.constant 0 : i32
    %c0_i32_1 = arith.constant 0 : i32
    return %c0_i32, %c0_i32_0 : i32, i32
  }
  func.func @transform_3(%arg0: i32) -> (i32, i32, i32) {
    %c0_i32 = arith.constant 0 : i32
    %c0_i32_0 = arith.constant 0 : i32
    %c0_i32_1 = arith.constant 0 : i32
    return %arg0, %c0_i32, %c0_i32_0 : i32, i32, i32
  }
}

module attributes {stable_mosaic.version = 11 : i64} {
  func.func @_bn1_relu_conv2_kernel(%arg0: i32, %arg1: memref<32x8xf32, #tpu.memory_space<vmem>>, %arg2: memref<1x8xf32, #tpu.memory_space<vmem>>, %arg3: memref<1x8xf32, #tpu.memory_space<vmem>>, %arg4: memref<40x8xf32, #tpu.memory_space<vmem>>, %arg5: memref<32x1xi32, #tpu.memory_space<vmem>>, %arg6: memref<32x8xf32, #tpu.memory_space<vmem>>, %arg7: memref<1x2x8xf32, #tpu.memory_space<vmem>>) attributes {dimension_semantics = [#tpu.dimension_semantics<parallel>], iteration_bounds = array<i64: 1>, scalar_prefetch = 0 : i64, scratch_operands = 0 : i64, tpu.core_type = #tpu.core_type<tc>, window_params = [{transform_indices = @transform_0, window_bounds = array<i64: 32, 8>}, {pipeline_mode = #tpu.pipeline_mode<synchronous>, transform_indices = @transform_1, window_bounds = array<i64: 1, 8>}, {pipeline_mode = #tpu.pipeline_mode<synchronous>, transform_indices = @transform_2, window_bounds = array<i64: 1, 8>}, {pipeline_mode = #tpu.pipeline_mode<synchronous>, transform_indices = @transform_3, window_bounds = array<i64: 40, 8>}, {pipeline_mode = #tpu.pipeline_mode<synchronous>, transform_indices = @transform_4, window_bounds = array<i64: 32, 1>}, {transform_indices = @transform_5, window_bounds = array<i64: 32, 8>}, {transform_indices = @transform_6, window_bounds = array<i64: 1, 2, 8>}]} {
    %c0 = arith.constant 0 : index
    %c0_0 = arith.constant 0 : index
    %0 = vector.load %arg1[%c0, %c0_0] : memref<32x8xf32, #tpu.memory_space<vmem>>, vector<32x8xf32>
    %c0_1 = arith.constant 0 : index
    %c0_2 = arith.constant 0 : index
    %1 = vector.load %arg2[%c0_1, %c0_2] : memref<1x8xf32, #tpu.memory_space<vmem>>, vector<1x8xf32>
    %2 = vector.broadcast %1 : vector<1x8xf32> to vector<32x8xf32>
    %3 = arith.mulf %0, %2 : vector<32x8xf32>
    %c0_3 = arith.constant 0 : index
    %c0_4 = arith.constant 0 : index
    %4 = vector.load %arg3[%c0_3, %c0_4] : memref<1x8xf32, #tpu.memory_space<vmem>>, vector<1x8xf32>
    %5 = vector.broadcast %4 : vector<1x8xf32> to vector<32x8xf32>
    %6 = arith.addf %3, %5 : vector<32x8xf32>
    %cst = arith.constant 0.000000e+00 : f32
    %7 = vector.broadcast %cst : f32 to vector<32x8xf32>
    %8 = arith.maximumf %6, %7 : vector<32x8xf32>
    %c0_5 = arith.constant 0 : index
    %c0_6 = arith.constant 0 : index
    %9 = vector.load %arg4[%c0_5, %c0_6] : memref<40x8xf32, #tpu.memory_space<vmem>>, vector<40x8xf32>
    %c0_7 = arith.constant 0 : index
    %c0_8 = arith.constant 0 : index
    %10 = vector.load %arg5[%c0_7, %c0_8] : memref<32x1xi32, #tpu.memory_space<vmem>>, vector<32x1xi32>
    %11 = vector.extract_strided_slice %8 {offsets = [30, 0], sizes = [2, 8], strides = [1, 1]} : vector<32x8xf32> to vector<2x8xf32>
    %12 = vector.extract_strided_slice %8 {offsets = [0, 0], sizes = [30, 8], strides = [1, 1]} : vector<32x8xf32> to vector<30x8xf32>
    %13 = tpu.concatenate %11, %12 in 0 : vector<2x8xf32>, vector<30x8xf32> -> vector<32x8xf32>
    %c-2_i32 = arith.constant -2 : i32
    %14 = vector.broadcast %c-2_i32 : i32 to vector<32x1xi32>
    %15 = arith.addi %10, %14 : vector<32x1xi32>
    %c0_i32 = arith.constant 0 : i32
    %16 = vector.broadcast %c0_i32 : i32 to vector<32x1xi32>
    %17 = arith.cmpi sge, %15, %16 : vector<32x1xi32>
    %c-2_i32_9 = arith.constant -2 : i32
    %18 = vector.broadcast %c-2_i32_9 : i32 to vector<32x1xi32>
    %19 = arith.addi %10, %18 : vector<32x1xi32>
    %c16_i32 = arith.constant 16 : i32
    %20 = vector.broadcast %c16_i32 : i32 to vector<32x1xi32>
    %21 = arith.cmpi slt, %19, %20 : vector<32x1xi32>
    %22 = arith.andi %17, %21 : vector<32x1xi1>
    %cst_10 = arith.constant 0.000000e+00 : f32
    %23 = vector.shape_cast %22 : vector<32x1xi1> to vector<32x1xi1>
    %24 = vector.broadcast %23 : vector<32x1xi1> to vector<32x8xi1>
    %25 = vector.broadcast %cst_10 : f32 to vector<32x8xf32>
    %26 = arith.select %24, %13, %25 : vector<32x8xi1>, vector<32x8xf32>
    %27 = vector.extract_strided_slice %8 {offsets = [31, 0], sizes = [1, 8], strides = [1, 1]} : vector<32x8xf32> to vector<1x8xf32>
    %28 = vector.extract_strided_slice %8 {offsets = [0, 0], sizes = [31, 8], strides = [1, 1]} : vector<32x8xf32> to vector<31x8xf32>
    %29 = tpu.concatenate %27, %28 in 0 : vector<1x8xf32>, vector<31x8xf32> -> vector<32x8xf32>
    %c-1_i32 = arith.constant -1 : i32
    %30 = vector.broadcast %c-1_i32 : i32 to vector<32x1xi32>
    %31 = arith.addi %10, %30 : vector<32x1xi32>
    %c0_i32_11 = arith.constant 0 : i32
    %32 = vector.broadcast %c0_i32_11 : i32 to vector<32x1xi32>
    %33 = arith.cmpi sge, %31, %32 : vector<32x1xi32>
    %c-1_i32_12 = arith.constant -1 : i32
    %34 = vector.broadcast %c-1_i32_12 : i32 to vector<32x1xi32>
    %35 = arith.addi %10, %34 : vector<32x1xi32>
    %c16_i32_13 = arith.constant 16 : i32
    %36 = vector.broadcast %c16_i32_13 : i32 to vector<32x1xi32>
    %37 = arith.cmpi slt, %35, %36 : vector<32x1xi32>
    %38 = arith.andi %33, %37 : vector<32x1xi1>
    %cst_14 = arith.constant 0.000000e+00 : f32
    %39 = vector.shape_cast %38 : vector<32x1xi1> to vector<32x1xi1>
    %40 = vector.broadcast %39 : vector<32x1xi1> to vector<32x8xi1>
    %41 = vector.broadcast %cst_14 : f32 to vector<32x8xf32>
    %42 = arith.select %40, %29, %41 : vector<32x8xi1>, vector<32x8xf32>
    %43 = vector.extract_strided_slice %8 {offsets = [1, 0], sizes = [31, 8], strides = [1, 1]} : vector<32x8xf32> to vector<31x8xf32>
    %44 = vector.extract_strided_slice %8 {offsets = [0, 0], sizes = [1, 8], strides = [1, 1]} : vector<32x8xf32> to vector<1x8xf32>
    %45 = tpu.concatenate %43, %44 in 0 : vector<31x8xf32>, vector<1x8xf32> -> vector<32x8xf32>
    %c1_i32 = arith.constant 1 : i32
    %46 = vector.broadcast %c1_i32 : i32 to vector<32x1xi32>
    %47 = arith.addi %10, %46 : vector<32x1xi32>
    %c0_i32_15 = arith.constant 0 : i32
    %48 = vector.broadcast %c0_i32_15 : i32 to vector<32x1xi32>
    %49 = arith.cmpi sge, %47, %48 : vector<32x1xi32>
    %c1_i32_16 = arith.constant 1 : i32
    %50 = vector.broadcast %c1_i32_16 : i32 to vector<32x1xi32>
    %51 = arith.addi %10, %50 : vector<32x1xi32>
    %c16_i32_17 = arith.constant 16 : i32
    %52 = vector.broadcast %c16_i32_17 : i32 to vector<32x1xi32>
    %53 = arith.cmpi slt, %51, %52 : vector<32x1xi32>
    %54 = arith.andi %49, %53 : vector<32x1xi1>
    %cst_18 = arith.constant 0.000000e+00 : f32
    %55 = vector.shape_cast %54 : vector<32x1xi1> to vector<32x1xi1>
    %56 = vector.broadcast %55 : vector<32x1xi1> to vector<32x8xi1>
    %57 = vector.broadcast %cst_18 : f32 to vector<32x8xf32>
    %58 = arith.select %56, %45, %57 : vector<32x8xi1>, vector<32x8xf32>
    %59 = vector.extract_strided_slice %8 {offsets = [2, 0], sizes = [30, 8], strides = [1, 1]} : vector<32x8xf32> to vector<30x8xf32>
    %60 = vector.extract_strided_slice %8 {offsets = [0, 0], sizes = [2, 8], strides = [1, 1]} : vector<32x8xf32> to vector<2x8xf32>
    %61 = tpu.concatenate %59, %60 in 0 : vector<30x8xf32>, vector<2x8xf32> -> vector<32x8xf32>
    %c2_i32 = arith.constant 2 : i32
    %62 = vector.broadcast %c2_i32 : i32 to vector<32x1xi32>
    %63 = arith.addi %10, %62 : vector<32x1xi32>
    %c0_i32_19 = arith.constant 0 : i32
    %64 = vector.broadcast %c0_i32_19 : i32 to vector<32x1xi32>
    %65 = arith.cmpi sge, %63, %64 : vector<32x1xi32>
    %c2_i32_20 = arith.constant 2 : i32
    %66 = vector.broadcast %c2_i32_20 : i32 to vector<32x1xi32>
    %67 = arith.addi %10, %66 : vector<32x1xi32>
    %c16_i32_21 = arith.constant 16 : i32
    %68 = vector.broadcast %c16_i32_21 : i32 to vector<32x1xi32>
    %69 = arith.cmpi slt, %67, %68 : vector<32x1xi32>
    %70 = arith.andi %65, %69 : vector<32x1xi1>
    %cst_22 = arith.constant 0.000000e+00 : f32
    %71 = vector.shape_cast %70 : vector<32x1xi1> to vector<32x1xi1>
    %72 = vector.broadcast %71 : vector<32x1xi1> to vector<32x8xi1>
    %73 = vector.broadcast %cst_22 : f32 to vector<32x8xf32>
    %74 = arith.select %72, %61, %73 : vector<32x8xi1>, vector<32x8xf32>
    %75 = tpu.concatenate %26, %42, %8, %58, %74 in 1 : vector<32x8xf32>, vector<32x8xf32>, vector<32x8xf32>, vector<32x8xf32>, vector<32x8xf32> -> vector<32x40xf32>
    %cst_23 = arith.constant dense<0.000000e+00> : vector<32x8xf32>
    %76 = tpu.matmul %75, %9, %cst_23 {dimension_numbers = #tpu.dot_dimension_numbers<[1], [0], [0], [1], [0, 0, 1, 1], [], []>} : vector<32x40xf32>, vector<40x8xf32>, vector<32x8xf32> -> vector<32x8xf32>
    %c0_24 = arith.constant 0 : index
    %c0_25 = arith.constant 0 : index
    %77 = vector.load %arg6[%c0_24, %c0_25] : memref<32x8xf32, #tpu.memory_space<vmem>>, vector<32x8xf32>
    tpu.vector_store %arg6[%c0_24, %c0_25], %76 {strides = array<i32>} : memref<32x8xf32, #tpu.memory_space<vmem>>, vector<32x8xf32>,
    %cst_26 = arith.constant dense<0.000000e+00> : vector<8xf32>
    %78 = vector.multi_reduction <add>, %76, %cst_26 [0] : vector<32x8xf32> to vector<8xf32>
    %79 = vector.shape_cast %78 : vector<8xf32> to vector<1x8xf32>
    %80 = arith.mulf %76, %76 : vector<32x8xf32>
    %cst_27 = arith.constant dense<0.000000e+00> : vector<8xf32>
    %81 = vector.multi_reduction <add>, %80, %cst_27 [0] : vector<32x8xf32> to vector<8xf32>
    %82 = vector.shape_cast %81 : vector<8xf32> to vector<1x8xf32>
    %83 = tpu.concatenate %79, %82 in 0 : vector<1x8xf32>, vector<1x8xf32> -> vector<2x8xf32>
    %c0_28 = arith.constant 0 : index
    %c0_29 = arith.constant 0 : index
    %c0_30 = arith.constant 0 : index
    %84 = vector.load %arg7[%c0_28, %c0_29, %c0_30] : memref<1x2x8xf32, #tpu.memory_space<vmem>>, vector<1x2x8xf32>
    %85 = vector.shape_cast %84 : vector<1x2x8xf32> to vector<2x8xf32>
    %86 = vector.shape_cast %83 : vector<2x8xf32> to vector<1x2x8xf32>
    tpu.vector_store %arg7[%c0_28, %c0_29, %c0_30], %86 {strides = array<i32>} : memref<1x2x8xf32, #tpu.memory_space<vmem>>, vector<1x2x8xf32>,
    return
  }
  func.func @transform_0(%arg0: i32) -> (i32, i32) {
    %c0_i32 = arith.constant 0 : i32
    %c0_i32_0 = arith.constant 0 : i32
    return %arg0, %c0_i32 : i32, i32
  }
  func.func @transform_1(%arg0: i32) -> (i32, i32) {
    %c0_i32 = arith.constant 0 : i32
    %c0_i32_0 = arith.constant 0 : i32
    %c0_i32_1 = arith.constant 0 : i32
    return %c0_i32, %c0_i32_0 : i32, i32
  }
  func.func @transform_2(%arg0: i32) -> (i32, i32) {
    %c0_i32 = arith.constant 0 : i32
    %c0_i32_0 = arith.constant 0 : i32
    %c0_i32_1 = arith.constant 0 : i32
    return %c0_i32, %c0_i32_0 : i32, i32
  }
  func.func @transform_3(%arg0: i32) -> (i32, i32) {
    %c0_i32 = arith.constant 0 : i32
    %c0_i32_0 = arith.constant 0 : i32
    %c0_i32_1 = arith.constant 0 : i32
    return %c0_i32, %c0_i32_0 : i32, i32
  }
  func.func @transform_4(%arg0: i32) -> (i32, i32) {
    %c0_i32 = arith.constant 0 : i32
    %c0_i32_0 = arith.constant 0 : i32
    %c0_i32_1 = arith.constant 0 : i32
    return %c0_i32, %c0_i32_0 : i32, i32
  }
  func.func @transform_5(%arg0: i32) -> (i32, i32) {
    %c0_i32 = arith.constant 0 : i32
    %c0_i32_0 = arith.constant 0 : i32
    return %arg0, %c0_i32 : i32, i32
  }
  func.func @transform_6(%arg0: i32) -> (i32, i32, i32) {
    %c0_i32 = arith.constant 0 : i32
    %c0_i32_0 = arith.constant 0 : i32
    %c0_i32_1 = arith.constant 0 : i32
    return %arg0, %c0_i32, %c0_i32_0 : i32, i32, i32
  }
}

</mosaic_0001>

<llo_original>
// kernel: double_conv_pallas.5
$region0: #{double_conv_pallas.5}
  #allocation0 [shape = 'u32[]', space=smem, size = 0x4, offset = 0x4, fixed_abs, tag = 'smem constant byte address 0x4 - core index']
  #allocation1 [shape = 'u32[72,128]{1,0:T(1,128)}', space=vmem, size = 0x9000, scoped, tag = 'internal scratch']
  %s0 = inlined_call_operand.vmem [shape: f32[32,8], index: 0, kind: input, shape index: {}]
  %s1 = inlined_call_operand.vmem [shape: f32[1,8], index: 1, kind: input, shape index: {}]
  %s2 = inlined_call_operand.vmem [shape: f32[1,8], index: 2, kind: input, shape index: {}]
  %s3 = inlined_call_operand.hbm [shape: f32[2,8,16], index: 3, kind: output, shape index: {}]
  %s4 = sld [smem:[#allocation0]]
  $region22: #{double_conv_pallas.5} parent=0
    _
  %s6 = ssub.s32 1, %s4
  %s7 = scalar_select 0, %s6, %s4
  $region1: #{double_conv_pallas.5} parent=0
    #allocation2 [shape = 'u8[8192]{0}', space=vmem, size = 0x2000, scoped, tag = 'output window, operand 0, single buffered']
    #allocation3 [shape = 's32[1]{0}', space=sflag, size = 0x4, scoped, tag = 'scoped memory for double_conv_pallas.5']
    %8 = vsyncpa [#allocation3], 0
    // Predicated region
    $region2: #{double_conv_pallas.5} parent=1 // pred_check
      _
    $region3: #{double_conv_pallas.5} parent=1 // pred_check_branch
      %10 = sbr.rel (0) target = $region5
    $region4: #{double_conv_pallas.5} parent=1 // pred_region
      _
    $region5: #{double_conv_pallas.5} parent=1 // pred_fallthru
      _
    // Predicated region
    $region6: #{double_conv_pallas.5} parent=1 // pred_check
      _
    $region7: #{double_conv_pallas.5} parent=1 // pred_check_branch
      %12 = sbr.rel (0) target = $region9
    $region8: #{double_conv_pallas.5} parent=1 // pred_region
      _
    $region9: #{double_conv_pallas.5} parent=1 // pred_fallthru
      _
    // Predicated region
    $region10: #{double_conv_pallas.5} parent=1 // pred_check
      _
    $region11: #{double_conv_pallas.5} parent=1 // pred_check_branch
      %14 = sbr.rel (0) target = $region13
    $region12: #{double_conv_pallas.5} parent=1 // pred_region
      _
    $region13: #{double_conv_pallas.5} parent=1 // pred_fallthru
      _
    %v15 = vld [vmem:[%s0] sm:$0xff]
    %v16 = vld [vmem:[%s0 + $0x8] sm:$0xff]
    %v17 = vld [vmem:[%s0 + $0x10] sm:$0xff]
    %v18 = vld [vmem:[%s0 + $0x18] sm:$0xff]
    %v19 = vld [vmem:[%s1] sm:$0x1]
    %v21 = vperm.slane %v19, 0
    %v23 = vmul.f32 %v15, %v21
    %v24 = vmul.f32 %v16, %v21
    %v25 = vmul.f32 %v17, %v21
    %v26 = vmul.f32 %v18, %v21
    %v27 = vld [vmem:[%s2] sm:$0x1]
    %v29 = vperm.slane %v27, 0
    %v31 = vadd.f32 %v23, %v29
    %v32 = vadd.f32 %v24, %v29
    %v33 = vadd.f32 %v25, %v29
    %v34 = vadd.f32 %v26, %v29
    %v35 = vmax.f32 %v31, 0.0
    %v36 = vmax.f32 %v32, 0.0
    %v37 = vmax.f32 %v33, 0.0
    %v38 = vmax.f32 %v34, 0.0
    %39 = vxpose.xlu0.b32.start [1/16] %v35, 128
    %40 = vxpose.xlu0.b32.cont [2/16] %v36, 128
    %41 = vxpose.xlu0.b32.cont [3/16] 0.0, 128
    %42 = vxpose.xlu0.b32.cont [4/16] 0.0, 128
    %43 = vxpose.xlu0.b32.cont [5/16] 0.0, 128
    %44 = vxpose.xlu0.b32.cont [6/16] 0.0, 128
    %45 = vxpose.xlu0.b32.cont [7/16] 0.0, 128
    %46 = vxpose.xlu0.b32.cont [8/16] 0.0, 128
    %47 = vxpose.xlu0.b32.cont [9/16] 0.0, 128
    %48 = vxpose.xlu0.b32.cont [10/16] 0.0, 128
    %49 = vxpose.xlu0.b32.cont [11/16] 0.0, 128
    %50 = vxpose.xlu0.b32.cont [12/16] 0.0, 128
    %51 = vxpose.xlu0.b32.cont [13/16] 0.0, 128
    %52 = vxpose.xlu0.b32.cont [14/16] 0.0, 128
    %53 = vxpose.xlu0.b32.cont [15/16] 0.0, 128
    %54 = vxpose.xlu0.b32.end [16/16] 0.0, 128
    %v55 = vpop.trf.xlu0
    %v56 = vpop.trf.xlu0
    %v57 = vpop.trf.xlu0
    %v58 = vpop.trf.xlu0
    %v59 = vpop.trf.xlu0
    %v60 = vpop.trf.xlu0
    %v61 = vpop.trf.xlu0
    %v62 = vpop.trf.xlu0
    %v63 = vpop.trf.xlu0
    %v64 = vpop.trf.xlu0
    %v65 = vpop.trf.xlu0
    %v66 = vpop.trf.xlu0
    %v67 = vpop.trf.xlu0
    %v68 = vpop.trf.xlu0
    %v69 = vpop.trf.xlu0
    %v70 = vpop.trf.xlu0
    %vm71 = vcmask 130048
    %72 = vst.msk [vmem:[#allocation2] sm:$0xff] %vm71, %v55
    %73 = vxpose.xlu0.b32.start [1/16] %v37, 128
    %74 = vxpose.xlu0.b32.cont [2/16] %v38, 128
    %75 = vxpose.xlu0.b32.cont [3/16] 0.0, 128
    %76 = vxpose.xlu0.b32.cont [4/16] 0.0, 128
    %77 = vxpose.xlu0.b32.cont [5/16] 0.0, 128
    %78 = vxpose.xlu0.b32.cont [6/16] 0.0, 128
    %79 = vxpose.xlu0.b32.cont [7/16] 0.0, 128
    %80 = vxpose.xlu0.b32.cont [8/16] 0.0, 128
    %81 = vxpose.xlu0.b32.cont [9/16] 0.0, 128
    %82 = vxpose.xlu0.b32.cont [10/16] 0.0, 128
    %83 = vxpose.xlu0.b32.cont [11/16] 0.0, 128
    %84 = vxpose.xlu0.b32.cont [12/16] 0.0, 128
    %85 = vxpose.xlu0.b32.cont [13/16] 0.0, 128
    %86 = vxpose.xlu0.b32.cont [14/16] 0.0, 128
    %87 = vxpose.xlu0.b32.cont [15/16] 0.0, 128
    %88 = vxpose.xlu0.b32.end [16/16] 0.0, 128
    %v89 = vpop.trf.xlu0
    %v90 = vpop.trf.xlu0
    %v91 = vpop.trf.xlu0
    %v92 = vpop.trf.xlu0
    %v93 = vpop.trf.xlu0
    %v94 = vpop.trf.xlu0
    %v95 = vpop.trf.xlu0
    %v96 = vpop.trf.xlu0
    %v97 = vpop.trf.xlu0
    %v98 = vpop.trf.xlu0
    %v99 = vpop.trf.xlu0
    %v100 = vpop.trf.xlu0
    %v101 = vpop.trf.xlu0
    %v102 = vpop.trf.xlu0
    %v103 = vpop.trf.xlu0
    %v104 = vpop.trf.xlu0
    %s105 = scalar_lea.vmem [#allocation2], 8
    %106 = vst.msk [vmem:[%s105] sm:$0xff] %vm71, %v89
    // Predicated region
    $region14: #{double_conv_pallas.5} parent=1 // pred_check
      _
    $region15: #{double_conv_pallas.5} parent=1 // pred_check_branch
      %108 = sbr.rel (0) target = $region17
    $region16: #{double_conv_pallas.5} parent=1 // pred_region
      %110 = vsyncadd [#allocation3], 0
      %s111 = sshll.u32 [#allocation2], 4
      %s112 = int_to_ptr.vmem [resolvable:$true] %s111
      %s113 = sshll.u32 %s3, 4
      %s114 = int_to_ptr.hbm [resolvable:$true] %s113
      %119 = dma.vmem_to_hbm [thread:$0]  %s112, 256, %s114, [#allocation3], 128, 128, 8
    $region17: #{double_conv_pallas.5} parent=1 // pred_fallthru
      _
    // Predicated region
    $region18: #{double_conv_pallas.5} parent=1 // pred_check
      _
    $region19: #{double_conv_pallas.5} parent=1 // pred_check_branch
      %121 = sbr.rel (0) target = $region21
    $region20: #{double_conv_pallas.5} parent=1 // pred_region
      %123 = dma.done [#allocation3], 256
    $region21: #{double_conv_pallas.5} parent=1 // pred_fallthru
      _
    %124 = vsyncpa [#allocation3], 1

// kernel: double_conv_pallas.3
$region0: #{double_conv_pallas.3}
  #allocation0 [shape = 'u32[]', space=smem, size = 0x4, offset = 0x4, fixed_abs, tag = 'smem constant byte address 0x4 - core index']
  #allocation1 [shape = 'u32[72,128]{1,0:T(1,128)}', space=vmem, size = 0x9000, scoped, tag = 'internal scratch']
  %s0 = inlined_call_operand.hbm [shape: f32[2,4,16], index: 0, kind: input, shape index: {}]
  %s1 = inlined_call_operand.vmem [shape: f32[20,8], index: 1, kind: input, shape index: {}]
  %s2 = inlined_call_operand.vmem [shape: f32[32,8], index: 2, kind: output, shape index: {0}]
  %s3 = inlined_call_operand.vmem [shape: f32[1,2,8], index: 3, kind: output, shape index: {1}]
  %4 = xla_tuple %s2, %s3
  %s5 = sld [smem:[#allocation0]]
  $region30: #{double_conv_pallas.3} parent=0
    _
  %s7 = ssub.s32 1, %s5
  %s8 = scalar_select 0, %s7, %s5
  $region1: #{double_conv_pallas.3} parent=0
    #allocation2 [shape = 'u8[4096]{0}', space=vmem, size = 0x1000, scoped, tag = 'input window, operand 0, single buffered']
    #allocation3 [shape = 's32[1]{0}', space=sflag, size = 0x4, scoped, tag = 'scoped memory for double_conv_pallas.3']
    %9 = vsyncpa [#allocation3], 0
    // Predicated region
    $region2: #{double_conv_pallas.3} parent=1 // pred_check
      _
    $region3: #{double_conv_pallas.3} parent=1 // pred_check_branch
      %11 = sbr.rel (0) target = $region5
    $region4: #{double_conv_pallas.3} parent=1 // pred_region
      %13 = vsyncadd [#allocation3], 0
      %s14 = sshll.u32 %s0, 4
      %s15 = int_to_ptr.hbm [resolvable:$true] %s14
      %s16 = sshll.u32 [#allocation2], 4
      %s17 = int_to_ptr.vmem [resolvable:$true] %s16
      %22 = dma.hbm_to_vmem [thread:$0]  %s15, 128, %s17, [#allocation3], 64, 64, 4
    $region5: #{double_conv_pallas.3} parent=1 // pred_fallthru
      _
    // Predicated region
    $region6: #{double_conv_pallas.3} parent=1 // pred_check
      _
    $region7: #{double_conv_pallas.3} parent=1 // pred_check_branch
      %24 = sbr.rel (0) target = $region9
    $region8: #{double_conv_pallas.3} parent=1 // pred_region
      _
    $region9: #{double_conv_pallas.3} parent=1 // pred_fallthru
      _
    // Predicated region
    $region10: #{double_conv_pallas.3} parent=1 // pred_check
      _
    $region11: #{double_conv_pallas.3} parent=1 // pred_check_branch
      %26 = sbr.rel (0) target = $region13
    $region12: #{double_conv_pallas.3} parent=1 // pred_region
      %28 = dma.done [#allocation3], 128
    $region13: #{double_conv_pallas.3} parent=1 // pred_fallthru
      _
    %v29 = vld [vmem:[%s1] sm:$0xff]
    %v30 = vld [vmem:[%s1 + $0x8] sm:$0xff]
    %v31 = vld [vmem:[%s1 + $0x10] sm:$0xf]
    %v32 = vlaneseq
    %v33 = vshrl.u32 %v32, 7
    %v34 = vadd.s32 %v33, 8
    %v35 = vld [vmem:[#allocation2] sm:$0xf]
    %36 = vxpose.xlu0.b32.start [1/16] %v35, 128
    %37 = vxpose.xlu0.b32.cont [2/16] 0.0, 128
    %38 = vxpose.xlu0.b32.cont [3/16] 0.0, 128
    %39 = vxpose.xlu0.b32.cont [4/16] 0.0, 128
    %40 = vxpose.xlu0.b32.cont [5/16] 0.0, 128
    %41 = vxpose.xlu0.b32.cont [6/16] 0.0, 128
    %42 = vxpose.xlu0.b32.cont [7/16] 0.0, 128
    %43 = vxpose.xlu0.b32.cont [8/16] 0.0, 128
    %44 = vxpose.xlu0.b32.cont [9/16] 0.0, 128
    %45 = vxpose.xlu0.b32.cont [10/16] 0.0, 128
    %46 = vxpose.xlu0.b32.cont [11/16] 0.0, 128
    %47 = vxpose.xlu0.b32.cont [12/16] 0.0, 128
    %48 = vxpose.xlu0.b32.cont [13/16] 0.0, 128
    %49 = vxpose.xlu0.b32.cont [14/16] 0.0, 128
    %50 = vxpose.xlu0.b32.cont [15/16] 0.0, 128
    %51 = vxpose.xlu0.b32.end [16/16] 0.0, 128
    %v52 = vpop.trf.xlu0
    %v53 = vpop.trf.xlu0
    %v54 = vpop.trf.xlu0
    %v55 = vpop.trf.xlu0
    %v56 = vpop.trf.xlu0
    %v57 = vpop.trf.xlu0
    %v58 = vpop.trf.xlu0
    %v59 = vpop.trf.xlu0
    %v60 = vpop.trf.xlu0
    %v61 = vpop.trf.xlu0
    %v62 = vpop.trf.xlu0
    %v63 = vpop.trf.xlu0
    %v64 = vpop.trf.xlu0
    %v65 = vpop.trf.xlu0
    %v66 = vpop.trf.xlu0
    %v67 = vpop.trf.xlu0
    %v69 = vrot.slane %v53, 6
    %vm72 = vcmask 1041408
    %v73 = vrot.slane %v52, 6
    %v74 = vsel %vm72, %v73, %v69
    %v77 = vsel %vm72, %v69, %v73
    %v78 = vadd.s32 %v33, 4294967294
    %v79 = vadd.s32 %v34, 4294967294
    %vm80 = vcmp.ge.s32.totalorder %v78, 0
    %vm81 = vcmp.ge.s32.totalorder %v79, 0
    %vm82 = vcmp.lt.s32.totalorder %v78, 16
    %vm83 = vcmp.lt.s32.totalorder %v79, 16
    %vm84 = vmand %vm80, %vm82
    %vm85 = vmand %vm81, %vm83
    %v86 = vsel %vm84, 1, 0
    %v87 = vsel %vm85, 1, 0
    %vm88 = vcmp.eq.s32.totalorder %v86, 1
    %vm89 = vcmp.eq.s32.totalorder %v87, 1
    %v90 = vsel %vm88, %v77, 0.0
    %v91 = vsel %vm89, %v74, 0.0
    %v92 = vrot.slane %v53, 7
    %vm94 = vcmask 1040384
    %v95 = vrot.slane %v52, 7
    %v96 = vsel %vm94, %v95, %v92
    %v99 = vsel %vm94, %v92, %v95
    %v100 = vadd.s32 %v33, 4294967295
    %v101 = vadd.s32 %v34, 4294967295
    %vm102 = vcmp.ge.s32.totalorder %v100, 0
    %vm103 = vcmp.ge.s32.totalorder %v101, 0
    %vm104 = vcmp.lt.s32.totalorder %v100, 16
    %vm105 = vcmp.lt.s32.totalorder %v101, 16
    %vm106 = vmand %vm102, %vm104
    %vm107 = vmand %vm103, %vm105
    %v108 = vsel %vm106, 1, 0
    %v109 = vsel %vm107, 1, 0
    %vm110 = vcmp.eq.s32.totalorder %v108, 1
    %vm111 = vcmp.eq.s32.totalorder %v109, 1
    %v112 = vsel %vm110, %v99, 0.0
    %v113 = vsel %vm111, %v96, 0.0
    %vm114 = vcmask 1046528
    %v115 = vrot.slane %v52, 1
    %v116 = vrot.slane %v53, 1
    %v117 = vsel %vm114, %v115, %v116
    %v121 = vsel %vm114, %v116, %v115
    %v122 = vadd.s32 %v33, 1
    %v123 = vadd.s32 %v34, 1
    %vm124 = vcmp.ge.s32.totalorder %v122, 0
    %vm125 = vcmp.ge.s32.totalorder %v123, 0
    %vm126 = vcmp.lt.s32.totalorder %v122, 16
    %vm127 = vcmp.lt.s32.totalorder %v123, 16
    %vm128 = vmand %vm124, %vm126
    %vm129 = vmand %vm125, %vm127
    %v130 = vsel %vm128, 1, 0
    %v131 = vsel %vm129, 1, 0
    %vm132 = vcmp.eq.s32.totalorder %v130, 1
    %vm133 = vcmp.eq.s32.totalorder %v131, 1
    %v134 = vsel %vm132, %v117, 0.0
    %v135 = vsel %vm133, %v121, 0.0
    %vm136 = vcmask 1045504
    %v137 = vrot.slane %v52, 2
    %v138 = vrot.slane %v53, 2
    %v139 = vsel %vm136, %v137, %v138
    %v143 = vsel %vm136, %v138, %v137
    %v144 = vadd.s32 %v33, 2
    %v145 = vadd.s32 %v34, 2
    %vm146 = vcmp.ge.s32.totalorder %v144, 0
    %vm147 = vcmp.ge.s32.totalorder %v145, 0
    %vm148 = vcmp.lt.s32.totalorder %v144, 16
    %vm149 = vcmp.lt.s32.totalorder %v145, 16
    %vm150 = vmand %vm146, %vm148
    %vm151 = vmand %vm147, %vm149
    %v152 = vsel %vm150, 1, 0
    %v153 = vsel %vm151, 1, 0
    %vm154 = vcmp.eq.s32.totalorder %v152, 1
    %vm155 = vcmp.eq.s32.totalorder %v153, 1
    %v156 = vsel %vm154, %v139, 0.0
    %v157 = vsel %vm155, %v143, 0.0
    %160 = vrot.lane.b32.xlu0 %v112, 4
    %v161 = vpop.permute.xlu0 %160
    %162 = vrot.lane.b32.xlu0 %v113, 4
    %v163 = vpop.permute.xlu0 %162
    %166 = vrot.lane.b32.xlu0 %v52, 8
    %v167 = vpop.permute.xlu0 %166
    %168 = vrot.lane.b32.xlu0 %v53, 8
    %v169 = vpop.permute.xlu0 %168
    %174 = vrot.lane.b32.xlu0 %v134, 12
    %v175 = vpop.permute.xlu0 %174
    %176 = vrot.lane.b32.xlu0 %v135, 12
    %v177 = vpop.permute.xlu0 %176
    %182 = vrot.lane.b32.xlu0 %v156, 16
    %v183 = vpop.permute.xlu0 %182
    %184 = vrot.lane.b32.xlu0 %v157, 16
    %v185 = vpop.permute.xlu0 %184
    %vm188 = vcmask 31744
    %v189 = vsel %vm188, %v90, %v161
    %v190 = vsel %vm188, %v91, %v163
    %vm191 = vcmask 64512
    %v192 = vsel %vm191, %v189, %v167
    %v193 = vsel %vm191, %v190, %v169
    %vm194 = vcmask 97280
    %v195 = vsel %vm194, %v192, %v175
    %v196 = vsel %vm194, %v193, %v177
    %vm197 = vcmask 130048
    %v198 = vsel %vm197, %v195, %v183
    %v199 = vsel %vm197, %v196, %v185
    %vm200 = vcmask 162816
    %v202 = vsel %vm200, %v198, 0
    %v205 = vsel %vm200, %v199, 0
    %vm207 = vcmask 1043456
    %v209 = vsel %vm207, %v31, 0
    %211 = vmatpush.msra.mxu0 0.0
    %212 = vmatpush.msra.mxu0 0.0
    %213 = vmatpush.msra.mxu0 0.0
    %214 = vmatpush.msra.mxu0 0.0
    %215 = vmatpush.msra.mxu0 0.0
    %216 = vmatpush.msra.mxu0 0.0
    %217 = vmatpush.msra.mxu0 0.0
    %218 = vmatpush.msra.mxu0 0.0
    %219 = vmatpush.msra.mxu0 0.0
    %220 = vmatpush.msra.mxu0 0.0
    %221 = vmatpush.msra.mxu0 0.0
    %222 = vmatpush.msra.mxu0 0.0
    %223 = vmatpush.msra.mxu0 0.0
    %224 = vmatpush.msra.mxu0 %v209
    %225 = vmatpush.msra.mxu0 %v30
    %226 = vmatpush.msra.mxu0 %v29
    %227 = vmatmul.f32.gmra.mxu0 %v202
    %v228 = vpop.f32.mrf.mxu0
    %v229 = vadd.f32 0.0, %v228
    %230 = vmatmul.f32.gmra.mxu0 %v205
    %v231 = vpop.f32.mrf.mxu0
    %v232 = vadd.f32 0.0, %v231
    %233 = vdwg.mxu0
    %234 = vst.msk [vmem:[%s2] sm:$0xff] %vm191, %v229
    %235 = vst.msk [vmem:[%s2 + $0x8] sm:$0xff] %vm191, %v232
    %v236 = vsel %vm191, %v229, 0.0
    %v237 = vsel %vm191, %v232, 0.0
    %v238 = vadd.f32 %v236, %v237
    %v239 = vrot.slane %v238, 4
    %v240 = vadd.f32 %v238, %v239
    %v241 = vrot.slane %v240, 2
    %v242 = vadd.f32 %v240, %v241
    %v243 = vrot.slane %v242, 1
    %v244 = vadd.f32 %v242, %v243
    %v245 = vadd.f32 %v244, 0.0
    %v246 = vmul.f32 %v229, %v229
    %v247 = vmul.f32 %v232, %v232
    %v248 = vsel %vm191, %v246, 0.0
    %v249 = vsel %vm191, %v247, 0.0
    %v250 = vadd.f32 %v248, %v249
    %v251 = vrot.slane %v250, 4
    %v252 = vadd.f32 %v250, %v251
    %v253 = vrot.slane %v252, 2
    %v254 = vadd.f32 %v252, %v253
    %v255 = vrot.slane %v254, 1
    %v256 = vadd.f32 %v254, %v255
    %v257 = vadd.f32 %v256, 0.0
    %s258 = scalar_lea.vmem [#allocation2], 4
    %v259 = vld [vmem:[%s258] sm:$0xf]
    %260 = vxpose.xlu0.b32.start [1/16] %v259, 128
    %261 = vxpose.xlu0.b32.cont [2/16] 0.0, 128
    %262 = vxpose.xlu0.b32.cont [3/16] 0.0, 128
    %263 = vxpose.xlu0.b32.cont [4/16] 0.0, 128
    %264 = vxpose.xlu0.b32.cont [5/16] 0.0, 128
    %265 = vxpose.xlu0.b32.cont [6/16] 0.0, 128
    %266 = vxpose.xlu0.b32.cont [7/16] 0.0, 128
    %267 = vxpose.xlu0.b32.cont [8/16] 0.0, 128
    %268 = vxpose.xlu0.b32.cont [9/16] 0.0, 128
    %269 = vxpose.xlu0.b32.cont [10/16] 0.0, 128
    %270 = vxpose.xlu0.b32.cont [11/16] 0.0, 128
    %271 = vxpose.xlu0.b32.cont [12/16] 0.0, 128
    %272 = vxpose.xlu0.b32.cont [13/16] 0.0, 128
    %273 = vxpose.xlu0.b32.cont [14/16] 0.0, 128
    %274 = vxpose.xlu0.b32.cont [15/16] 0.0, 128
    %275 = vxpose.xlu0.b32.end [16/16] 0.0, 128
    %v276 = vpop.trf.xlu0
    %v277 = vpop.trf.xlu0
    %v278 = vpop.trf.xlu0
    %v279 = vpop.trf.xlu0
    %v280 = vpop.trf.xlu0
    %v281 = vpop.trf.xlu0
    %v282 = vpop.trf.xlu0
    %v283 = vpop.trf.xlu0
    %v284 = vpop.trf.xlu0
    %v285 = vpop.trf.xlu0
    %v286 = vpop.trf.xlu0
    %v287 = vpop.trf.xlu0
    %v288 = vpop.trf.xlu0
    %v289 = vpop.trf.xlu0
    %v290 = vpop.trf.xlu0
    %v291 = vpop.trf.xlu0
    %v293 = vrot.slane %v277, 6
    %v296 = vrot.slane %v276, 6
    %v297 = vsel %vm72, %v296, %v293
    %v300 = vsel %vm72, %v293, %v296
    %v301 = vsel %vm88, %v300, 0.0
    %v302 = vsel %vm89, %v297, 0.0
    %v303 = vrot.slane %v277, 7
    %v305 = vrot.slane %v276, 7
    %v306 = vsel %vm94, %v305, %v303
    %v309 = vsel %vm94, %v303, %v305
    %v310 = vsel %vm110, %v309, 0.0
    %v311 = vsel %vm111, %v306, 0.0
    %v312 = vrot.slane %v276, 1
    %v313 = vrot.slane %v277, 1
    %v314 = vsel %vm114, %v312, %v313
    %v318 = vsel %vm114, %v313, %v312
    %v319 = vsel %vm132, %v314, 0.0
    %v320 = vsel %vm133, %v318, 0.0
    %v321 = vrot.slane %v276, 2
    %v322 = vrot.slane %v277, 2
    %v323 = vsel %vm136, %v321, %v322
    %v327 = vsel %vm136, %v322, %v321
    %v328 = vsel %vm154, %v323, 0.0
    %v329 = vsel %vm155, %v327, 0.0
    %332 = vrot.lane.b32.xlu0 %v310, 4
    %v333 = vpop.permute.xlu0 %332
    %334 = vrot.lane.b32.xlu0 %v311, 4
    %v335 = vpop.permute.xlu0 %334
    %338 = vrot.lane.b32.xlu0 %v276, 8
    %v339 = vpop.permute.xlu0 %338
    %340 = vrot.lane.b32.xlu0 %v277, 8
    %v341 = vpop.permute.xlu0 %340
    %346 = vrot.lane.b32.xlu0 %v319, 12
    %v347 = vpop.permute.xlu0 %346
    %348 = vrot.lane.b32.xlu0 %v320, 12
    %v349 = vpop.permute.xlu0 %348
    %354 = vrot.lane.b32.xlu0 %v328, 16
    %v355 = vpop.permute.xlu0 %354
    %356 = vrot.lane.b32.xlu0 %v329, 16
    %v357 = vpop.permute.xlu0 %356
    %v360 = vsel %vm188, %v301, %v333
    %v361 = vsel %vm188, %v302, %v335
    %v362 = vsel %vm191, %v360, %v339
    %v363 = vsel %vm191, %v361, %v341
    %v364 = vsel %vm194, %v362, %v347
    %v365 = vsel %vm194, %v363, %v349
    %v366 = vsel %vm197, %v364, %v355
    %v367 = vsel %vm197, %v365, %v357
    %v369 = vsel %vm200, %v366, 0
    %v372 = vsel %vm200, %v367, 0
    %374 = vmatpush.msra.mxu0 0.0
    %375 = vmatpush.msra.mxu0 0.0
    %376 = vmatpush.msra.mxu0 0.0
    %377 = vmatpush.msra.mxu0 0.0
    %378 = vmatpush.msra.mxu0 0.0
    %379 = vmatpush.msra.mxu0 0.0
    %380 = vmatpush.msra.mxu0 0.0
    %381 = vmatpush.msra.mxu0 0.0
    %382 = vmatpush.msra.mxu0 0.0
    %383 = vmatpush.msra.mxu0 0.0
    %384 = vmatpush.msra.mxu0 0.0
    %385 = vmatpush.msra.mxu0 0.0
    %386 = vmatpush.msra.mxu0 0.0
    %387 = vmatpush.msra.mxu0 %v209
    %388 = vmatpush.msra.mxu0 %v30
    %389 = vmatpush.msra.mxu0 %v29
    %390 = vmatmul.f32.gmra.mxu0 %v369
    %v391 = vpop.f32.mrf.mxu0
    %v392 = vadd.f32 0.0, %v391
    %393 = vmatmul.f32.gmra.mxu0 %v372
    %v394 = vpop.f32.mrf.mxu0
    %v395 = vadd.f32 0.0, %v394
    %396 = vdwg.mxu0
    %397 = vst.msk [vmem:[%s2 + $0x10] sm:$0xff] %vm191, %v392
    %398 = vst.msk [vmem:[%s2 + $0x18] sm:$0xff] %vm191, %v395
    %v399 = vsel %vm191, %v392, 0.0
    %v400 = vsel %vm191, %v395, 0.0
    %v401 = vadd.f32 %v399, %v400
    %v402 = vrot.slane %v401, 4
    %v403 = vadd.f32 %v401, %v402
    %v404 = vrot.slane %v403, 2
    %v405 = vadd.f32 %v403, %v404
    %v406 = vrot.slane %v405, 1
    %v407 = vadd.f32 %v405, %v406
    %v408 = vadd.f32 %v245, %v407
    %v409 = vmul.f32 %v392, %v392
    %v410 = vmul.f32 %v395, %v395
    %v411 = vsel %vm191, %v409, 0.0
    %v412 = vsel %vm191, %v410, 0.0
    %v413 = vadd.f32 %v411, %v412
    %v414 = vrot.slane %v413, 4
    %v415 = vadd.f32 %v413, %v414
    %v416 = vrot.slane %v415, 2
    %v417 = vadd.f32 %v415, %v416
    %v418 = vrot.slane %v417, 1
    %v419 = vadd.f32 %v417, %v418
    %v420 = vadd.f32 %v257, %v419
    %v421 = vsel %vm94, %v408, %v420
    %vm422 = vcmask 58368
    %423 = vst.msk [vmem:[%s3] sm:$0x3] %vm422, %v421
    // Predicated region
    $region14: #{double_conv_pallas.3} parent=1 // pred_check
      _
    $region15: #{double_conv_pallas.3} parent=1 // pred_check_branch
      %425 = sbr.rel (0) target = $region17
    $region16: #{double_conv_pallas.3} parent=1 // pred_region
      _
    $region17: #{double_conv_pallas.3} parent=1 // pred_fallthru
      _
    // Predicated region
    $region18: #{double_conv_pallas.3} parent=1 // pred_check
      _
    $region19: #{double_conv_pallas.3} parent=1 // pred_check_branch
      %427 = sbr.rel (0) target = $region21
    $region20: #{double_conv_pallas.3} parent=1 // pred_region
      _
    $region21: #{double_conv_pallas.3} parent=1 // pred_fallthru
      _
    // Predicated region
    $region22: #{double_conv_pallas.3} parent=1 // pred_check
      _
    $region23: #{double_conv_pallas.3} parent=1 // pred_check_branch
      %429 = sbr.rel (0) target = $region25
    $region24: #{double_conv_pallas.3} parent=1 // pred_region
      _
    $region25: #{double_conv_pallas.3} parent=1 // pred_fallthru
      _
    // Predicated region
    $region26: #{double_conv_pallas.3} parent=1 // pred_check
      _
    $region27: #{double_conv_pallas.3} parent=1 // pred_check_branch
      %431 = sbr.rel (0) target = $region29
    $region28: #{double_conv_pallas.3} parent=1 // pred_region
      _
    $region29: #{double_conv_pallas.3} parent=1 // pred_fallthru
      _
    %432 = vsyncpa [#allocation3], 1

// kernel: double_conv_pallas.4
$region0: #{double_conv_pallas.4}
  #allocation0 [shape = 'u32[]', space=smem, size = 0x4, offset = 0x4, fixed_abs, tag = 'smem constant byte address 0x4 - core index']
  #allocation1 [shape = 'u32[72,128]{1,0:T(1,128)}', space=vmem, size = 0x9000, scoped, tag = 'internal scratch']
  %s0 = inlined_call_operand.vmem [shape: f32[32,8], index: 0, kind: input, shape index: {}, may-alias: {0,5}]
  %s1 = inlined_call_operand.vmem [shape: f32[1,8], index: 1, kind: input, shape index: {}]
  %s2 = inlined_call_operand.vmem [shape: f32[1,8], index: 2, kind: input, shape index: {}]
  %s3 = inlined_call_operand.vmem [shape: f32[40,8], index: 3, kind: input, shape index: {}]
  %s4 = inlined_call_operand.vmem [shape: s32[32,1], index: 4, kind: input, shape index: {}]
  %s5 = inlined_call_operand.vmem [shape: f32[32,8], index: 5, kind: output, shape index: {0}, may-alias: {0,5}]
  %s6 = inlined_call_operand.vmem [shape: f32[1,2,8], index: 6, kind: output, shape index: {1}]
  %7 = xla_tuple %s5, %s6
  %s8 = sld [smem:[#allocation0]]
  $region38: #{double_conv_pallas.4} parent=0
    _
  %s10 = ssub.s32 1, %s8
  %s11 = scalar_select 0, %s10, %s8
  // Predicated region
  $region2: #{double_conv_pallas.4} parent=0 // pred_check
    _
  $region3: #{double_conv_pallas.4} parent=0 // pred_check_branch
    %13 = sbr.rel (0) target = $region5
  $region4: #{double_conv_pallas.4} parent=0 // pred_region
    _
  $region5: #{double_conv_pallas.4} parent=0 // pred_fallthru
    _
  // Predicated region
  $region6: #{double_conv_pallas.4} parent=0 // pred_check
    _
  $region7: #{double_conv_pallas.4} parent=0 // pred_check_branch
    %15 = sbr.rel (0) target = $region9
  $region8: #{double_conv_pallas.4} parent=0 // pred_region
    _
  $region9: #{double_conv_pallas.4} parent=0 // pred_fallthru
    _
  // Predicated region
  $region10: #{double_conv_pallas.4} parent=0 // pred_check
    _
  $region11: #{double_conv_pallas.4} parent=0 // pred_check_branch
    %17 = sbr.rel (0) target = $region13
  $region12: #{double_conv_pallas.4} parent=0 // pred_region
    _
  $region13: #{double_conv_pallas.4} parent=0 // pred_fallthru
    _
  // Predicated region
  $region14: #{double_conv_pallas.4} parent=0 // pred_check
    _
  $region15: #{double_conv_pallas.4} parent=0 // pred_check_branch
    %19 = sbr.rel (0) target = $region17
  $region16: #{double_conv_pallas.4} parent=0 // pred_region
    _
  $region17: #{double_conv_pallas.4} parent=0 // pred_fallthru
    _
  // Predicated region
  $region18: #{double_conv_pallas.4} parent=0 // pred_check
    _
  $region19: #{double_conv_pallas.4} parent=0 // pred_check_branch
    %21 = sbr.rel (0) target = $region21
  $region20: #{double_conv_pallas.4} parent=0 // pred_region
    _
  $region21: #{double_conv_pallas.4} parent=0 // pred_fallthru
    _
  %v22 = vld [vmem:[%s0] sm:$0xff]
  %v23 = vld [vmem:[%s0 + $0x8] sm:$0xff]
  %v24 = vld [vmem:[%s0 + $0x10] sm:$0xff]
  %v25 = vld [vmem:[%s0 + $0x18] sm:$0xff]
  %v26 = vld [vmem:[%s1] sm:$0x1]
  %v28 = vperm.slane %v26, 0
  %v30 = vmul.f32 %v22, %v28
  %v31 = vmul.f32 %v23, %v28
  %v32 = vmul.f32 %v24, %v28
  %v33 = vmul.f32 %v25, %v28
  %v34 = vld [vmem:[%s2] sm:$0x1]
  %v36 = vperm.slane %v34, 0
  %v38 = vadd.f32 %v30, %v36
  %v39 = vadd.f32 %v31, %v36
  %v40 = vadd.f32 %v32, %v36
  %v41 = vadd.f32 %v33, %v36
  %v42 = vmax.f32 %v38, 0.0
  %v43 = vmax.f32 %v39, 0.0
  %v44 = vmax.f32 %v40, 0.0
  %v45 = vmax.f32 %v41, 0.0
  %v46 = vld [vmem:[%s3] sm:$0xff]
  %v47 = vld [vmem:[%s3 + $0x8] sm:$0xff]
  %v48 = vld [vmem:[%s3 + $0x10] sm:$0xff]
  %v49 = vld [vmem:[%s3 + $0x18] sm:$0xff]
  %v50 = vld [vmem:[%s3 + $0x20] sm:$0xff]
  %v51 = vld [vmem:[%s4] sm:$0xff]
  %v52 = vld [vmem:[%s4 + $0x8] sm:$0xff]
  %v53 = vld [vmem:[%s4 + $0x10] sm:$0xff]
  %v54 = vld [vmem:[%s4 + $0x18] sm:$0xff]
  %v56 = vrot.slane %v45, 6
  %vm61 = vcmask 1041408
  %v62 = vrot.slane %v42, 6
  %v63 = vrot.slane %v43, 6
  %v64 = vsel %vm61, %v62, %v63
  %v65 = vrot.slane %v44, 6
  %v66 = vsel %vm61, %v63, %v65
  %v67 = vsel %vm61, %v65, %v56
  %v72 = vsel %vm61, %v56, %v62
  %v73 = vadd.s32 %v51, 4294967294
  %v74 = vadd.s32 %v52, 4294967294
  %v75 = vadd.s32 %v53, 4294967294
  %v76 = vadd.s32 %v54, 4294967294
  %vm77 = vcmp.ge.s32.totalorder %v73, 0
  %vm78 = vcmp.ge.s32.totalorder %v74, 0
  %vm79 = vcmp.ge.s32.totalorder %v75, 0
  %vm80 = vcmp.ge.s32.totalorder %v76, 0
  %vm81 = vcmp.lt.s32.totalorder %v73, 16
  %vm82 = vcmp.lt.s32.totalorder %v74, 16
  %vm83 = vcmp.lt.s32.totalorder %v75, 16
  %vm84 = vcmp.lt.s32.totalorder %v76, 16
  %vm85 = vmand %vm77, %vm81
  %vm86 = vmand %vm78, %vm82
  %vm87 = vmand %vm79, %vm83
  %vm88 = vmand %vm80, %vm84
  %v89 = vsel %vm85, 1, 0
  %v90 = vsel %vm86, 1, 0
  %v91 = vsel %vm87, 1, 0
  %v92 = vsel %vm88, 1, 0
  %93 = vset.pattern.permute.xlu0 0
  %94 = vperm.xlu0 %93, %v89
  %v95 = vpop.permute.xlu0 %94
  %96 = vset.pattern.permute.xlu0 0
  %97 = vperm.xlu0 %96, %v90
  %v98 = vpop.permute.xlu0 %97
  %99 = vset.pattern.permute.xlu0 0
  %100 = vperm.xlu0 %99, %v91
  %v101 = vpop.permute.xlu0 %100
  %102 = vset.pattern.permute.xlu0 0
  %103 = vperm.xlu0 %102, %v92
  %v104 = vpop.permute.xlu0 %103
  %vm105 = vcmp.eq.s32.totalorder %v95, 1
  %vm106 = vcmp.eq.s32.totalorder %v98, 1
  %vm107 = vcmp.eq.s32.totalorder %v101, 1
  %vm108 = vcmp.eq.s32.totalorder %v104, 1
  %v109 = vsel %vm105, %v72, 0.0
  %v110 = vsel %vm106, %v64, 0.0
  %v111 = vsel %vm107, %v66, 0.0
  %v112 = vsel %vm108, %v67, 0.0
  %v113 = vrot.slane %v45, 7
  %vm115 = vcmask 1040384
  %v116 = vrot.slane %v42, 7
  %v117 = vrot.slane %v43, 7
  %v118 = vsel %vm115, %v116, %v117
  %v119 = vrot.slane %v44, 7
  %v120 = vsel %vm115, %v117, %v119
  %v121 = vsel %vm115, %v119, %v113
  %v126 = vsel %vm115, %v113, %v116
  %v127 = vadd.s32 %v51, 4294967295
  %v128 = vadd.s32 %v52, 4294967295
  %v129 = vadd.s32 %v53, 4294967295
  %v130 = vadd.s32 %v54, 4294967295
  %vm131 = vcmp.ge.s32.totalorder %v127, 0
  %vm132 = vcmp.ge.s32.totalorder %v128, 0
  %vm133 = vcmp.ge.s32.totalorder %v129, 0
  %vm134 = vcmp.ge.s32.totalorder %v130, 0
  %vm135 = vcmp.lt.s32.totalorder %v127, 16
  %vm136 = vcmp.lt.s32.totalorder %v128, 16
  %vm137 = vcmp.lt.s32.totalorder %v129, 16
  %vm138 = vcmp.lt.s32.totalorder %v130, 16
  %vm139 = vmand %vm131, %vm135
  %vm140 = vmand %vm132, %vm136
  %vm141 = vmand %vm133, %vm137
  %vm142 = vmand %vm134, %vm138
  %v143 = vsel %vm139, 1, 0
  %v144 = vsel %vm140, 1, 0
  %v145 = vsel %vm141, 1, 0
  %v146 = vsel %vm142, 1, 0
  %147 = vset.pattern.permute.xlu0 0
  %148 = vperm.xlu0 %147, %v143
  %v149 = vpop.permute.xlu0 %148
  %150 = vset.pattern.permute.xlu0 0
  %151 = vperm.xlu0 %150, %v144
  %v152 = vpop.permute.xlu0 %151
  %153 = vset.pattern.permute.xlu0 0
  %154 = vperm.xlu0 %153, %v145
  %v155 = vpop.permute.xlu0 %154
  %156 = vset.pattern.permute.xlu0 0
  %157 = vperm.xlu0 %156, %v146
  %v158 = vpop.permute.xlu0 %157
  %vm159 = vcmp.eq.s32.totalorder %v149, 1
  %vm160 = vcmp.eq.s32.totalorder %v152, 1
  %vm161 = vcmp.eq.s32.totalorder %v155, 1
  %vm162 = vcmp.eq.s32.totalorder %v158, 1
  %v163 = vsel %vm159, %v126, 0.0
  %v164 = vsel %vm160, %v118, 0.0
  %v165 = vsel %vm161, %v120, 0.0
  %v166 = vsel %vm162, %v121, 0.0
  %vm167 = vcmask 1046528
  %v168 = vrot.slane %v42, 1
  %v169 = vrot.slane %v43, 1
  %v170 = vsel %vm167, %v168, %v169
  %v171 = vrot.slane %v44, 1
  %v172 = vsel %vm167, %v169, %v171
  %v173 = vrot.slane %v45, 1
  %v174 = vsel %vm167, %v171, %v173
  %v180 = vsel %vm167, %v173, %v168
  %v181 = vadd.s32 %v51, 1
  %v182 = vadd.s32 %v52, 1
  %v183 = vadd.s32 %v53, 1
  %v184 = vadd.s32 %v54, 1
  %vm185 = vcmp.ge.s32.totalorder %v181, 0
  %vm186 = vcmp.ge.s32.totalorder %v182, 0
  %vm187 = vcmp.ge.s32.totalorder %v183, 0
  %vm188 = vcmp.ge.s32.totalorder %v184, 0
  %vm189 = vcmp.lt.s32.totalorder %v181, 16
  %vm190 = vcmp.lt.s32.totalorder %v182, 16
  %vm191 = vcmp.lt.s32.totalorder %v183, 16
  %vm192 = vcmp.lt.s32.totalorder %v184, 16
  %vm193 = vmand %vm185, %vm189
  %vm194 = vmand %vm186, %vm190
  %vm195 = vmand %vm187, %vm191
  %vm196 = vmand %vm188, %vm192
  %v197 = vsel %vm193, 1, 0
  %v198 = vsel %vm194, 1, 0
  %v199 = vsel %vm195, 1, 0
  %v200 = vsel %vm196, 1, 0
  %201 = vset.pattern.permute.xlu0 0
  %202 = vperm.xlu0 %201, %v197
  %v203 = vpop.permute.xlu0 %202
  %204 = vset.pattern.permute.xlu0 0
  %205 = vperm.xlu0 %204, %v198
  %v206 = vpop.permute.xlu0 %205
  %207 = vset.pattern.permute.xlu0 0
  %208 = vperm.xlu0 %207, %v199
  %v209 = vpop.permute.xlu0 %208
  %210 = vset.pattern.permute.xlu0 0
  %211 = vperm.xlu0 %210, %v200
  %v212 = vpop.permute.xlu0 %211
  %vm213 = vcmp.eq.s32.totalorder %v203, 1
  %vm214 = vcmp.eq.s32.totalorder %v206, 1
  %vm215 = vcmp.eq.s32.totalorder %v209, 1
  %vm216 = vcmp.eq.s32.totalorder %v212, 1
  %v217 = vsel %vm213, %v170, 0.0
  %v218 = vsel %vm214, %v172, 0.0
  %v219 = vsel %vm215, %v174, 0.0
  %v220 = vsel %vm216, %v180, 0.0
  %vm221 = vcmask 1045504
  %v222 = vrot.slane %v42, 2
  %v223 = vrot.slane %v43, 2
  %v224 = vsel %vm221, %v222, %v223
  %v225 = vrot.slane %v44, 2
  %v226 = vsel %vm221, %v223, %v225
  %v227 = vrot.slane %v45, 2
  %v228 = vsel %vm221, %v225, %v227
  %v234 = vsel %vm221, %v227, %v222
  %v235 = vadd.s32 %v51, 2
  %v236 = vadd.s32 %v52, 2
  %v237 = vadd.s32 %v53, 2
  %v238 = vadd.s32 %v54, 2
  %vm239 = vcmp.ge.s32.totalorder %v235, 0
  %vm240 = vcmp.ge.s32.totalorder %v236, 0
  %vm241 = vcmp.ge.s32.totalorder %v237, 0
  %vm242 = vcmp.ge.s32.totalorder %v238, 0
  %vm243 = vcmp.lt.s32.totalorder %v235, 16
  %vm244 = vcmp.lt.s32.totalorder %v236, 16
  %vm245 = vcmp.lt.s32.totalorder %v237, 16
  %vm246 = vcmp.lt.s32.totalorder %v238, 16
  %vm247 = vmand %vm239, %vm243
  %vm248 = vmand %vm240, %vm244
  %vm249 = vmand %vm241, %vm245
  %vm250 = vmand %vm242, %vm246
  %v251 = vsel %vm247, 1, 0
  %v252 = vsel %vm248, 1, 0
  %v253 = vsel %vm249, 1, 0
  %v254 = vsel %vm250, 1, 0
  %255 = vset.pattern.permute.xlu0 0
  %256 = vperm.xlu0 %255, %v251
  %v257 = vpop.permute.xlu0 %256
  %258 = vset.pattern.permute.xlu0 0
  %259 = vperm.xlu0 %258, %v252
  %v260 = vpop.permute.xlu0 %259
  %261 = vset.pattern.permute.xlu0 0
  %262 = vperm.xlu0 %261, %v253
  %v263 = vpop.permute.xlu0 %262
  %264 = vset.pattern.permute.xlu0 0
  %265 = vperm.xlu0 %264, %v254
  %v266 = vpop.permute.xlu0 %265
  %vm267 = vcmp.eq.s32.totalorder %v257, 1
  %vm268 = vcmp.eq.s32.totalorder %v260, 1
  %vm269 = vcmp.eq.s32.totalorder %v263, 1
  %vm270 = vcmp.eq.s32.totalorder %v266, 1
  %v271 = vsel %vm267, %v224, 0.0
  %v272 = vsel %vm268, %v226, 0.0
  %v273 = vsel %vm269, %v228, 0.0
  %v274 = vsel %vm270, %v234, 0.0
  %279 = vrot.lane.b32.xlu0 %v163, 8
  %v280 = vpop.permute.xlu0 %279
  %281 = vrot.lane.b32.xlu0 %v164, 8
  %v282 = vpop.permute.xlu0 %281
  %283 = vrot.lane.b32.xlu0 %v165, 8
  %v284 = vpop.permute.xlu0 %283
  %285 = vrot.lane.b32.xlu0 %v166, 8
  %v286 = vpop.permute.xlu0 %285
  %291 = vrot.lane.b32.xlu0 %v42, 16
  %v292 = vpop.permute.xlu0 %291
  %293 = vrot.lane.b32.xlu0 %v43, 16
  %v294 = vpop.permute.xlu0 %293
  %295 = vrot.lane.b32.xlu0 %v44, 16
  %v296 = vpop.permute.xlu0 %295
  %297 = vrot.lane.b32.xlu0 %v45, 16
  %v298 = vpop.permute.xlu0 %297
  %307 = vrot.lane.b32.xlu0 %v217, 24
  %v308 = vpop.permute.xlu0 %307
  %309 = vrot.lane.b32.xlu0 %v218, 24
  %v310 = vpop.permute.xlu0 %309
  %311 = vrot.lane.b32.xlu0 %v219, 24
  %v312 = vpop.permute.xlu0 %311
  %313 = vrot.lane.b32.xlu0 %v220, 24
  %v314 = vpop.permute.xlu0 %313
  %323 = vrot.lane.b32.xlu0 %v271, 32
  %v324 = vpop.permute.xlu0 %323
  %325 = vrot.lane.b32.xlu0 %v272, 32
  %v326 = vpop.permute.xlu0 %325
  %327 = vrot.lane.b32.xlu0 %v273, 32
  %v328 = vpop.permute.xlu0 %327
  %329 = vrot.lane.b32.xlu0 %v274, 32
  %v330 = vpop.permute.xlu0 %329
  %vm335 = vcmask 64512
  %v336 = vsel %vm335, %v109, %v280
  %v337 = vsel %vm335, %v110, %v282
  %v338 = vsel %vm335, %v111, %v284
  %v339 = vsel %vm335, %v112, %v286
  %vm340 = vcmask 130048
  %v341 = vsel %vm340, %v336, %v292
  %v342 = vsel %vm340, %v337, %v294
  %v343 = vsel %vm340, %v338, %v296
  %v344 = vsel %vm340, %v339, %v298
  %vm345 = vcmask 195584
  %v346 = vsel %vm345, %v341, %v308
  %v347 = vsel %vm345, %v342, %v310
  %v348 = vsel %vm345, %v343, %v312
  %v349 = vsel %vm345, %v344, %v314
  %vm350 = vcmask 261120
  %v351 = vsel %vm350, %v346, %v324
  %v352 = vsel %vm350, %v347, %v326
  %v353 = vsel %vm350, %v348, %v328
  %v354 = vsel %vm350, %v349, %v330
  %vm355 = vcmask 326656
  %v357 = vsel %vm355, %v351, 0
  %v360 = vsel %vm355, %v352, 0
  %v363 = vsel %vm355, %v353, 0
  %v366 = vsel %vm355, %v354, 0
  %368 = vmatpush.msra.mxu0 0.0
  %369 = vmatpush.msra.mxu0 0.0
  %370 = vmatpush.msra.mxu0 0.0
  %371 = vmatpush.msra.mxu0 0.0
  %372 = vmatpush.msra.mxu0 0.0
  %373 = vmatpush.msra.mxu0 0.0
  %374 = vmatpush.msra.mxu0 0.0
  %375 = vmatpush.msra.mxu0 0.0
  %376 = vmatpush.msra.mxu0 0.0
  %377 = vmatpush.msra.mxu0 0.0
  %378 = vmatpush.msra.mxu0 0.0
  %379 = vmatpush.msra.mxu0 %v50
  %380 = vmatpush.msra.mxu0 %v49
  %381 = vmatpush.msra.mxu0 %v48
  %382 = vmatpush.msra.mxu0 %v47
  %383 = vmatpush.msra.mxu0 %v46
  %384 = vmatmul.f32.gmra.mxu0 %v357
  %v385 = vpop.f32.mrf.mxu0
  %v386 = vadd.f32 0.0, %v385
  %387 = vmatmul.f32.gmra.mxu0 %v360
  %v388 = vpop.f32.mrf.mxu0
  %v389 = vadd.f32 0.0, %v388
  %390 = vmatmul.f32.gmra.mxu0 %v363
  %v391 = vpop.f32.mrf.mxu0
  %v392 = vadd.f32 0.0, %v391
  %393 = vmatmul.f32.gmra.mxu0 %v366
  %v394 = vpop.f32.mrf.mxu0
  %v395 = vadd.f32 0.0, %v394
  %396 = vdwg.mxu0
  %397 = vst.msk [vmem:[%s5] sm:$0xff] %vm335, %v386
  %398 = vst.msk [vmem:[%s5 + $0x8] sm:$0xff] %vm335, %v389
  %399 = vst.msk [vmem:[%s5 + $0x10] sm:$0xff] %vm335, %v392
  %400 = vst.msk [vmem:[%s5 + $0x18] sm:$0xff] %vm335, %v395
  %v401 = vsel %vm335, %v386, 0.0
  %v402 = vsel %vm335, %v389, 0.0
  %v403 = vadd.f32 %v401, %v402
  %v404 = vsel %vm335, %v392, 0.0
  %v405 = vadd.f32 %v403, %v404
  %v406 = vsel %vm335, %v395, 0.0
  %v407 = vadd.f32 %v405, %v406
  %v408 = vrot.slane %v407, 4
  %v409 = vadd.f32 %v407, %v408
  %v410 = vrot.slane %v409, 2
  %v411 = vadd.f32 %v409, %v410
  %v412 = vrot.slane %v411, 1
  %v413 = vadd.f32 %v411, %v412
  %v414 = vmul.f32 %v386, %v386
  %v415 = vmul.f32 %v389, %v389
  %v416 = vmul.f32 %v392, %v392
  %v417 = vmul.f32 %v395, %v395
  %v418 = vsel %vm335, %v414, 0.0
  %v419 = vsel %vm335, %v415, 0.0
  %v420 = vadd.f32 %v418, %v419
  %v421 = vsel %vm335, %v416, 0.0
  %v422 = vadd.f32 %v420, %v421
  %v423 = vsel %vm335, %v417, 0.0
  %v424 = vadd.f32 %v422, %v423
  %v425 = vrot.slane %v424, 4
  %v426 = vadd.f32 %v424, %v425
  %v427 = vrot.slane %v426, 2
  %v428 = vadd.f32 %v426, %v427
  %v429 = vrot.slane %v428, 1
  %v430 = vadd.f32 %v428, %v429
  %v431 = vsel %vm115, %v413, %v430
  %vm432 = vcmask 58368
  %433 = vst.msk [vmem:[%s6] sm:$0x3] %vm432, %v431
  // Predicated region
  $region22: #{double_conv_pallas.4} parent=0 // pred_check
    _
  $region23: #{double_conv_pallas.4} parent=0 // pred_check_branch
    %435 = sbr.rel (0) target = $region25
  $region24: #{double_conv_pallas.4} parent=0 // pred_region
    _
  $region25: #{double_conv_pallas.4} parent=0 // pred_fallthru
    _
  // Predicated region
  $region26: #{double_conv_pallas.4} parent=0 // pred_check
    _
  $region27: #{double_conv_pallas.4} parent=0 // pred_check_branch
    %437 = sbr.rel (0) target = $region29
  $region28: #{double_conv_pallas.4} parent=0 // pred_region
    _
  $region29: #{double_conv_pallas.4} parent=0 // pred_fallthru
    _
  // Predicated region
  $region30: #{double_conv_pallas.4} parent=0 // pred_check
    _
  $region31: #{double_conv_pallas.4} parent=0 // pred_check_branch
    %439 = sbr.rel (0) target = $region33
  $region32: #{double_conv_pallas.4} parent=0 // pred_region
    _
  $region33: #{double_conv_pallas.4} parent=0 // pred_fallthru
    _
  // Predicated region
  $region34: #{double_conv_pallas.4} parent=0 // pred_check
    _
  $region35: #{double_conv_pallas.4} parent=0 // pred_check_branch
    %441 = sbr.rel (0) target = $region37
  $region36: #{double_conv_pallas.4} parent=0 // pred_region
    _
  $region37: #{double_conv_pallas.4} parent=0 // pred_fallthru
    _

</llo_original>
